<compile_context>
chip_gen: v7x
topology: tpu7x:2x2x1
jax: 0.10.0
libtpu: 0.0.40
codegen_flags: <defaults>
</compile_context>

<pallas_src>
import functools
import numpy as np

import jax
import jax.numpy as jnp
from jax.experimental import pallas as pl
from jax.experimental.pallas import tpu as pltpu


# ----------------------------- fused Pallas kernel ---------------------------

def _mstcn2_kernel(x_ref,
                   pg_in_w_ref, pg_in_b_ref, pg_w_ref, pg_b_ref,
                   pg_out_w_ref, pg_out_b_ref,
                   rs_in_w_ref, rs_in_b_ref, rs_wd_ref, rs_bd_ref,
                   rs_w1_ref, rs_b1_ref, rs_out_w_ref, rs_out_b_ref,
                   out_ref, fpad_ref,
                   *, T, Dpad, pg_dilations, r_dilations, num_R):
    """Whole MS-TCN2 forward for one batch element, fully VMEM resident.

    fpad_ref is (F, T + 2*Dpad); columns [0, Dpad) and [Dpad+T, Dpad+2*Dpad)
    are the zero halo and are NEVER written after the initial clear below.
    """
    F = fpad_ref.shape[0]
    center = pl.ds(Dpad, T)

    def mm(w, a):
        # Weights are pre-cast to bf16 offline; cast the activation operand so
        # the MXU runs bf16 x bf16 with f32 accumulation (native on all gens).
        return jnp.dot(w, a.astype(jnp.bfloat16),
                       preferred_element_type=jnp.float32)

    # Zero ONLY the halo slabs (lane-aligned, unmasked stores).  Done every
    # grid step because scratch is per-TensorCore on megacore parts.
    zeros_halo = jnp.zeros((F, Dpad), jnp.float32)
    fpad_ref[:, pl.ds(0, Dpad)] = zeros_halo
    fpad_ref[:, pl.ds(Dpad + T, Dpad)] = zeros_halo

    # ---------------- Prediction Generation stage ----------------
    fpad_ref[:, center] = mm(pg_in_w_ref[...], x_ref[...]) + pg_in_b_ref[...]

    for i, (d1, d2) in enumerate(pg_dilations):
        f_row = fpad_ref[...]                       # one load per layer
        f_c = f_row[:, Dpad:Dpad + T]

        def tap(o, _f_row=f_row):
            return _f_row[:, Dpad + o:Dpad + o + T]

        # Both dilated branches + the fused 1x1 conv collapse (after offline
        # weight folding, with the shared center tap deduplicated) into ONE
        # (F, 5F) x (5F, T) matmul.
        stacked = jnp.concatenate(
            [tap(-d1), f_c, tap(d1), tap(-d2), tap(d2)], axis=0)    # (5F, T)
        fused = mm(pg_w_ref[i], stacked) + pg_b_ref[i]
        # dropout == identity (eval mode); residual add
        fpad_ref[:, center] = jnp.maximum(fused, 0.0) + f_c

    cur = mm(pg_out_w_ref[...], fpad_ref[:, center]) + pg_out_b_ref[...]
    out_ref[0] = cur

    # ---------------- Refinement stages ----------------
    for r in range(num_R):
        # softmax over the class axis (exact divide: the result feeds every
        # subsequent stage), fused with the stage-input 1x1 conv.
        m = jnp.max(cur, axis=0, keepdims=True)
        e = jnp.exp(cur - m)
        p = e / jnp.sum(e, axis=0, keepdims=True)
        fpad_ref[:, center] = mm(rs_in_w_ref[r], p) + rs_in_b_ref[r]

        for j, d in enumerate(r_dilations):
            f_row = fpad_ref[...]
            f_c = f_row[:, Dpad:Dpad + T]
            stacked = jnp.concatenate(
                [f_row[:, Dpad - d:Dpad - d + T], f_c,
                 f_row[:, Dpad + d:Dpad + d + T]], axis=0)          # (3F, T)
            h = jnp.maximum(mm(rs_wd_ref[r, j], stacked) + rs_bd_ref[r, j], 0.0)
            # dropout == identity (eval mode); residual add
            fpad_ref[:, center] = f_c + mm(rs_w1_ref[r, j], h) + rs_b1_ref[r, j]

        cur = mm(rs_out_w_ref[r], fpad_ref[:, center]) + rs_out_b_ref[r]
        out_ref[1 + r] = cur


# ----------------------------- pallas_call wrapper ---------------------------

def ms_tcn2_forward(kparams, x):
    """Fused MS-TCN2 forward. `kparams` is the output of fold_params()."""
    N, dim, T = x.shape
    L_PG, F, _ = kparams["pg_w"].shape
    C = kparams["pg_out_w"].shape[0]
    num_R, L_R = kparams["rs_wd"].shape[:2]
    S = num_R + 1

    pg_dilations = [(2 ** (L_PG - 1 - i), 2 ** i) for i in range(L_PG)]
    r_dilations = [2 ** j for j in range(L_R)]
    Dmax = max([d for pair in pg_dilations for d in pair] + r_dilations)
    # Lane-aligned halo so the hot center window starts at a multiple of 128.
    Dpad = pl.cdiv(Dmax, 128) * 128

    kernel = functools.partial(
        _mstcn2_kernel, T=T, Dpad=Dpad,
        pg_dilations=pg_dilations, r_dilations=r_dilations, num_R=num_R)

    names = ("pg_in_w", "pg_in_b", "pg_w", "pg_b", "pg_out_w", "pg_out_b",
             "rs_in_w", "rs_in_b", "rs_wd", "rs_bd", "rs_w1", "rs_b1",
             "rs_out_w", "rs_out_b")
    weights = [kparams[k] for k in names]

    def param_spec(shape):
        zero_idx = (0,) * len(shape)
        return pl.BlockSpec(tuple(shape), lambda n, _z=zero_idx: _z)

    in_specs = ([pl.BlockSpec((None, dim, T), lambda n: (n, 0, 0))]
                + [param_spec(w.shape) for w in weights])
    # One stacked output (S, N, C, T); batch dim squeezed per grid step.
    out_specs = pl.BlockSpec((S, None, C, T), lambda n: (0, n, 0, 0))
    out_shape = jax.ShapeDtypeStruct((S, N, C, T), jnp.float32)

    # VMEM budget: scratch + double-buffered x/out blocks + (double-buffered)
    # weights, with 2x headroom, clamped to fit v7x's 64 MiB per-TC VMEM.
    scratch_bytes = F * (T + 2 * Dpad) * 4
    io_bytes = 2 * (dim * T * 4 + S * C * T * 4)
    w_bytes = sum(int(np.prod(w.shape)) * w.dtype.itemsize for w in weights)
    vmem_limit = int(min(60 * 2 ** 20,
                         max(8 * 2 ** 20,
                             2 * (scratch_bytes + io_bytes + 2 * w_bytes))))

    return pl.pallas_call(
        kernel,
        out_shape=out_shape,
        grid=(N,),
        in_specs=in_specs,
        out_specs=out_specs,
        scratch_shapes=[pltpu.VMEM((F, T + 2 * Dpad), jnp.float32)],
        compiler_params=pltpu.CompilerParams(
            dimension_semantics=("parallel",),
            vmem_limit_bytes=vmem_limit),
    )(x, *weights)


# ----------------------------- parameters ------------------------------------

def _conv1d_init(key, cout, cin, k):
    # PyTorch Conv1d default init: U(-1/sqrt(cin*k), 1/sqrt(cin*k))
    kw, kb = jax.random.split(key)
    bound = 1.0 / np.sqrt(cin * k)
    w = jax.random.uniform(kw, (cout, cin, k), jnp.float32, -bound, bound)
    b = jax.random.uniform(kb, (cout, 1), jnp.float32, -bound, bound)
    return w, b


def init_raw_params(key, num_layers_PG, num_layers_R, num_R, F, dim, C):
    """Parameters in torch Conv1d layout, mirroring the PyTorch module."""
    n_keys = 2 + 3 * num_layers_PG + num_R * (2 + 2 * num_layers_R)
    keys = iter(jax.random.split(key, n_keys))
    raw = {}

    w, b = _conv1d_init(next(keys), F, dim, 1)
    pg = {"in_w": w[..., 0], "in_b": b, "layers": []}
    for i in range(num_layers_PG):
        w1, b1 = _conv1d_init(next(keys), F, F, 3)
        w2, b2 = _conv1d_init(next(keys), F, F, 3)
        wf, bf = _conv1d_init(next(keys), F, 2 * F, 1)
        pg["layers"].append(dict(
            d1=2 ** (num_layers_PG - 1 - i), d2=2 ** i,
            w1=w1, b1=b1, w2=w2, b2=b2, wf=wf[..., 0], bf=bf))
    w, b = _conv1d_init(next(keys), C, F, 1)
    pg["out_w"], pg["out_b"] = w[..., 0], b
    raw["pg"] = pg

    raw["rs"] = []
    for _ in range(num_R):
        w, b = _conv1d_init(next(keys), F, C, 1)
        r = {"in_w": w[..., 0], "in_b": b, "layers": []}
        for j in range(num_layers_R):
            wd, bd = _conv1d_init(next(keys), F, F, 3)
            w1, b1 = _conv1d_init(next(keys), F, F, 1)
            r["layers"].append(dict(d=2 ** j, wd=wd, bd=bd, w1=w1[..., 0], b1=b1))
        w, b = _conv1d_init(next(keys), C, F, 1)
        r["out_w"], r["out_b"] = w[..., 0], b
        raw["rs"].append(r)
    return raw


def fold_params(raw):
    """Fold/stack torch-layout params into the fused-kernel layout.

    Folds the 1x1 fusion conv into the dilated branches, deduplicates the
    shared center tap (so the PG fused weight is (F, 5F)), stacks per-layer
    weights on leading axes and stores matmul weights in bf16 (biases in f32).
    """
    bf16 = jnp.bfloat16
    pg = raw["pg"]
    F = pg["in_w"].shape[0]

    pg_w, pg_b = [], []
    for lyr in pg["layers"]:
        wfa, wfc = lyr["wf"][:, :F], lyr["wf"][:, F:]
        w1f = jnp.einsum("oa,ack->ock", wfa, lyr["w1"])          # (F, F, 3)
        w2f = jnp.einsum("oa,ack->ock", wfc, lyr["w2"])          # (F, F, 3)
        # Column blocks match stacked = [x(t-d1), x(t), x(t+d1), x(t-d2), x(t+d2)]
        pg_w.append(jnp.concatenate(
            [w1f[:, :, 0],
             w1f[:, :, 1] + w2f[:, :, 1],      # shared center tap (dedup)
             w1f[:, :, 2],
             w2f[:, :, 0],
             w2f[:, :, 2]], axis=1))                              # (F, 5F)
        pg_b.append(lyr["bf"] + wfa @ lyr["b1"] + wfc @ lyr["b2"])

    rs_in_w, rs_in_b, rs_out_w, rs_out_b = [], [], [], []
    rs_wd, rs_bd, rs_w1, rs_b1 = [], [], [], []
    for r in raw["rs"]:
        rs_in_w.append(r["in_w"]); rs_in_b.append(r["in_b"])
        rs_wd.append(jnp.stack([jnp.concatenate(
            [l["wd"][:, :, 0], l["wd"][:, :, 1], l["wd"][:, :, 2]], axis=1)
            for l in r["layers"]]))                               # (L_R, F, 3F)
        rs_bd.append(jnp.stack([l["bd"] for l in r["layers"]]))
        rs_w1.append(jnp.stack([l["w1"] for l in r["layers"]]))
        rs_b1.append(jnp.stack([l["b1"] for l in r["layers"]]))
        rs_out_w.append(r["out_w"]); rs_out_b.append(r["out_b"])

    return dict(
        pg_in_w=pg["in_w"].astype(bf16), pg_in_b=pg["in_b"],
        pg_w=jnp.stack(pg_w).astype(bf16), pg_b=jnp.stack(pg_b),
        pg_out_w=pg["out_w"].astype(bf16), pg_out_b=pg["out_b"],
        rs_in_w=jnp.stack(rs_in_w).astype(bf16), rs_in_b=jnp.stack(rs_in_b),
        rs_wd=jnp.stack(rs_wd).astype(bf16), rs_bd=jnp.stack(rs_bd),
        rs_w1=jnp.stack(rs_w1).astype(bf16), rs_b1=jnp.stack(rs_b1),
        rs_out_w=jnp.stack(rs_out_w).astype(bf16), rs_out_b=jnp.stack(rs_out_b))


# ----------------------------- pure-JAX reference ----------------------------

def _ref_pointwise(x, w, b):
    return jnp.einsum("oc,nct->not", w, x) + b[None]


def _ref_dilconv(x, w, b, d):
    # w: (Cout, Cin, 3) torch layout; padding == dilation == d
    T = x.shape[-1]
    xp = jnp.pad(x, ((0, 0), (0, 0), (d, d)))
    out = sum(jnp.einsum("oc,nct->not", w[:, :, k], xp[:, :, k * d:k * d + T])
              for k in range(3))
    return out + b[None]


def ms_tcn2_reference(raw, x):
    pg = raw["pg"]
    f = _ref_pointwise(x, pg["in_w"], pg["in_b"])
    F = f.shape[1]
    for lyr in pg["layers"]:
        a = _ref_dilconv(f, lyr["w1"], lyr["b1"], lyr["d1"])
        c = _ref_dilconv(f, lyr["w2"], lyr["b2"], lyr["d2"])
        fused = (jnp.einsum("oc,nct->not", lyr["wf"][:, :F], a)
                 + jnp.einsum("oc,nct->not", lyr["wf"][:, F:], c)
                 + lyr["bf"][None])
        f = jnp.maximum(fused, 0.0) + f
    out = _ref_pointwise(f, pg["out_w"], pg["out_b"])
    outputs = [out]
    for r in raw["rs"]:
        h = _ref_pointwise(jax.nn.softmax(out, axis=1), r["in_w"], r["in_b"])
        for lyr in r["layers"]:
            t = jnp.maximum(_ref_dilconv(h, lyr["wd"], lyr["bd"], lyr["d"]), 0.0)
            h = h + _ref_pointwise(t, lyr["w1"], lyr["b1"])
        out = _ref_pointwise(h, r["out_w"], r["out_b"])
        outputs.append(out)
    return jnp.stack(outputs, axis=0)


# ----------------------------- main -------------------------------------------

if __name__ == "__main__":
    # Small MS-TCN2 config
    num_layers_PG = 3
    num_layers_R = 2
    num_R = 2
    num_f_maps = 16
    dim = 8
    num_classes = 8
    N, T = 2, 128   # T multiple of 128 -> lane-dense vregs and unmasked stores

    key = jax.random.PRNGKey(0)
    kx, kp = jax.random.split(key)
    x = jax.random.normal(kx, (N, dim, T), jnp.float32)

    raw = init_raw_params(kp, num_layers_PG, num_layers_R, num_R,
                          num_f_maps, dim, num_classes)
    kparams = fold_params(raw)

    out = jax.block_until_ready(ms_tcn2_forward(kparams, x))
    assert out.shape == (num_R + 1, N, num_classes, T), out.shape

    ref = jax.block_until_ready(ms_tcn2_reference(raw, x))
    # Tolerance covers the offline weight folding (re-associated sums) and the
    # bf16 MXU operands (f32 accumulation) vs. the all-f32 reference.
    np.testing.assert_allclose(np.asarray(out), np.asarray(ref),
                               rtol=2e-2, atol=2e-2)

    print("KERNEL_OK")
</pallas_src>

<mosaic_0001>
module attributes {stable_mosaic.version = 11 : i64} {
  func.func @_mstcn2_kernel(%arg0: i32, %arg1: memref<1x8x128xf32, #tpu.memory_space<vmem>>, %arg2: memref<16x8xbf16, #tpu.memory_space<vmem>>, %arg3: memref<16x1xf32, #tpu.memory_space<vmem>>, %arg4: memref<3x16x80xbf16, #tpu.memory_space<vmem>>, %arg5: memref<3x16x1xf32, #tpu.memory_space<vmem>>, %arg6: memref<8x16xbf16, #tpu.memory_space<vmem>>, %arg7: memref<8x1xf32, #tpu.memory_space<vmem>>, %arg8: memref<2x16x8xbf16, #tpu.memory_space<vmem>>, %arg9: memref<2x16x1xf32, #tpu.memory_space<vmem>>, %arg10: memref<2x2x16x48xbf16, #tpu.memory_space<vmem>>, %arg11: memref<2x2x16x1xf32, #tpu.memory_space<vmem>>, %arg12: memref<2x2x16x16xbf16, #tpu.memory_space<vmem>>, %arg13: memref<2x2x16x1xf32, #tpu.memory_space<vmem>>, %arg14: memref<2x8x16xbf16, #tpu.memory_space<vmem>>, %arg15: memref<2x8x1xf32, #tpu.memory_space<vmem>>, %arg16: memref<3x1x8x128xf32, #tpu.memory_space<vmem>>, %arg17: memref<16x384xf32, #tpu.memory_space<vmem>>) attributes {dimension_semantics = [#tpu.dimension_semantics<parallel>], iteration_bounds = array<i64: 2>, scalar_prefetch = 0 : i64, scratch_operands = 1 : i64, tpu.core_type = #tpu.core_type<tc>, window_params = [{transform_indices = @transform_0, window_bounds = array<i64: 1, 8, 128>}, {pipeline_mode = #tpu.pipeline_mode<synchronous>, transform_indices = @transform_1, window_bounds = array<i64: 16, 8>}, {pipeline_mode = #tpu.pipeline_mode<synchronous>, transform_indices = @transform_2, window_bounds = array<i64: 16, 1>}, {pipeline_mode = #tpu.pipeline_mode<synchronous>, transform_indices = @transform_3, window_bounds = array<i64: 3, 16, 80>}, {pipeline_mode = #tpu.pipeline_mode<synchronous>, transform_indices = @transform_4, window_bounds = array<i64: 3, 16, 1>}, {pipeline_mode = #tpu.pipeline_mode<synchronous>, transform_indices = @transform_5, window_bounds = array<i64: 8, 16>}, {pipeline_mode = #tpu.pipeline_mode<synchronous>, transform_indices = @transform_6, window_bounds = array<i64: 8, 1>}, {pipeline_mode = #tpu.pipeline_mode<synchronous>, transform_indices = @transform_7, window_bounds = array<i64: 2, 16, 8>}, {pipeline_mode = #tpu.pipeline_mode<synchronous>, transform_indices = @transform_8, window_bounds = array<i64: 2, 16, 1>}, {pipeline_mode = #tpu.pipeline_mode<synchronous>, transform_indices = @transform_9, window_bounds = array<i64: 2, 2, 16, 48>}, {pipeline_mode = #tpu.pipeline_mode<synchronous>, transform_indices = @transform_10, window_bounds = array<i64: 2, 2, 16, 1>}, {pipeline_mode = #tpu.pipeline_mode<synchronous>, transform_indices = @transform_11, window_bounds = array<i64: 2, 2, 16, 16>}, {pipeline_mode = #tpu.pipeline_mode<synchronous>, transform_indices = @transform_12, window_bounds = array<i64: 2, 2, 16, 1>}, {pipeline_mode = #tpu.pipeline_mode<synchronous>, transform_indices = @transform_13, window_bounds = array<i64: 2, 8, 16>}, {pipeline_mode = #tpu.pipeline_mode<synchronous>, transform_indices = @transform_14, window_bounds = array<i64: 2, 8, 1>}, {transform_indices = @transform_15, window_bounds = array<i64: 3, 1, 8, 128>}]} {
    %cst = arith.constant 0.000000e+00 : f32
    %0 = vector.broadcast %cst : f32 to vector<16x128xf32>
    %c0 = arith.constant 0 : index
    %c0_0 = arith.constant 0 : index
    %1 = vector.load %arg17[%c0, %c0_0] : memref<16x384xf32, #tpu.memory_space<vmem>>, vector<16x128xf32>
    tpu.vector_store %arg17[%c0, %c0_0], %0 {strides = array<i32>} : memref<16x384xf32, #tpu.memory_space<vmem>>, vector<16x128xf32>,
    %c0_1 = arith.constant 0 : index
    %c256 = arith.constant 256 : index
    %2 = vector.load %arg17[%c0_1, %c256] : memref<16x384xf32, #tpu.memory_space<vmem>>, vector<16x128xf32>
    tpu.vector_store %arg17[%c0_1, %c256], %0 {strides = array<i32>} : memref<16x384xf32, #tpu.memory_space<vmem>>, vector<16x128xf32>,
    %c0_2 = arith.constant 0 : index
    %c0_3 = arith.constant 0 : index
    %3 = vector.load %arg2[%c0_2, %c0_3] : memref<16x8xbf16, #tpu.memory_space<vmem>>, vector<16x8xbf16>
    %c0_4 = arith.constant 0 : index
    %c0_5 = arith.constant 0 : index
    %c0_6 = arith.constant 0 : index
    %4 = vector.load %arg1[%c0_4, %c0_5, %c0_6] : memref<1x8x128xf32, #tpu.memory_space<vmem>>, vector<1x8x128xf32>
    %5 = vector.shape_cast %4 : vector<1x8x128xf32> to vector<8x128xf32>
    %6 = arith.truncf %5 : vector<8x128xf32> to vector<8x128xbf16>
    %cst_7 = arith.constant dense<0.000000e+00> : vector<16x128xf32>
    %7 = tpu.matmul %3, %6, %cst_7 {dimension_numbers = #tpu.dot_dimension_numbers<[1], [0], [0], [1], [0, 0, 1, 1], [], []>} : vector<16x8xbf16>, vector<8x128xbf16>, vector<16x128xf32> -> vector<16x128xf32>
    %c0_8 = arith.constant 0 : index
    %c0_9 = arith.constant 0 : index
    %8 = vector.load %arg3[%c0_8, %c0_9] : memref<16x1xf32, #tpu.memory_space<vmem>>, vector<16x1xf32>
    %9 = vector.broadcast %8 : vector<16x1xf32> to vector<16x128xf32>
    %10 = arith.addf %7, %9 : vector<16x128xf32>
    %c0_10 = arith.constant 0 : index
    %c128 = arith.constant 128 : index
    %11 = vector.load %arg17[%c0_10, %c128] : memref<16x384xf32, #tpu.memory_space<vmem>>, vector<16x128xf32>
    tpu.vector_store %arg17[%c0_10, %c128], %10 {strides = array<i32>} : memref<16x384xf32, #tpu.memory_space<vmem>>, vector<16x128xf32>,
    %c0_11 = arith.constant 0 : index
    %c0_12 = arith.constant 0 : index
    %12 = vector.load %arg17[%c0_11, %c0_12] : memref<16x384xf32, #tpu.memory_space<vmem>>, vector<16x384xf32>
    %13 = vector.extract_strided_slice %12 {offsets = [0, 128], sizes = [16, 128], strides = [1, 1]} : vector<16x384xf32> to vector<16x128xf32>
    %14 = vector.extract_strided_slice %12 {offsets = [0, 124], sizes = [16, 128], strides = [1, 1]} : vector<16x384xf32> to vector<16x128xf32>
    %15 = vector.extract_strided_slice %12 {offsets = [0, 132], sizes = [16, 128], strides = [1, 1]} : vector<16x384xf32> to vector<16x128xf32>
    %16 = vector.extract_strided_slice %12 {offsets = [0, 127], sizes = [16, 128], strides = [1, 1]} : vector<16x384xf32> to vector<16x128xf32>
    %17 = vector.extract_strided_slice %12 {offsets = [0, 129], sizes = [16, 128], strides = [1, 1]} : vector<16x384xf32> to vector<16x128xf32>
    %18 = tpu.concatenate %14, %13, %15, %16, %17 in 0 : vector<16x128xf32>, vector<16x128xf32>, vector<16x128xf32>, vector<16x128xf32>, vector<16x128xf32> -> vector<80x128xf32>
    %c0_13 = arith.constant 0 : index
    %c0_14 = arith.constant 0 : index
    %c0_15 = arith.constant 0 : index
    %19 = vector.load %arg4[%c0_13, %c0_14, %c0_15] : memref<3x16x80xbf16, #tpu.memory_space<vmem>>, vector<1x16x80xbf16>
    %20 = vector.shape_cast %19 : vector<1x16x80xbf16> to vector<16x80xbf16>
    %21 = arith.truncf %18 : vector<80x128xf32> to vector<80x128xbf16>
    %cst_16 = arith.constant dense<0.000000e+00> : vector<16x128xf32>
    %22 = tpu.matmul %20, %21, %cst_16 {dimension_numbers = #tpu.dot_dimension_numbers<[1], [0], [0], [1], [0, 0, 1, 1], [], []>} : vector<16x80xbf16>, vector<80x128xbf16>, vector<16x128xf32> -> vector<16x128xf32>
    %c0_17 = arith.constant 0 : index
    %c0_18 = arith.constant 0 : index
    %c0_19 = arith.constant 0 : index
    %23 = vector.load %arg5[%c0_17, %c0_18, %c0_19] : memref<3x16x1xf32, #tpu.memory_space<vmem>>, vector<1x16x1xf32>
    %24 = vector.shape_cast %23 : vector<1x16x1xf32> to vector<16x1xf32>
    %25 = vector.broadcast %24 : vector<16x1xf32> to vector<16x128xf32>
    %26 = arith.addf %22, %25 : vector<16x128xf32>
    %cst_20 = arith.constant 0.000000e+00 : f32
    %27 = vector.broadcast %cst_20 : f32 to vector<16x128xf32>
    %28 = arith.maximumf %26, %27 : vector<16x128xf32>
    %29 = arith.addf %28, %13 : vector<16x128xf32>
    %c0_21 = arith.constant 0 : index
    %c128_22 = arith.constant 128 : index
    %30 = vector.load %arg17[%c0_21, %c128_22] : memref<16x384xf32, #tpu.memory_space<vmem>>, vector<16x128xf32>
    tpu.vector_store %arg17[%c0_21, %c128_22], %29 {strides = array<i32>} : memref<16x384xf32, #tpu.memory_space<vmem>>, vector<16x128xf32>,
    %c0_23 = arith.constant 0 : index
    %c0_24 = arith.constant 0 : index
    %31 = vector.load %arg17[%c0_23, %c0_24] : memref<16x384xf32, #tpu.memory_space<vmem>>, vector<16x384xf32>
    %32 = vector.extract_strided_slice %31 {offsets = [0, 128], sizes = [16, 128], strides = [1, 1]} : vector<16x384xf32> to vector<16x128xf32>
    %33 = vector.extract_strided_slice %31 {offsets = [0, 126], sizes = [16, 128], strides = [1, 1]} : vector<16x384xf32> to vector<16x128xf32>
    %34 = vector.extract_strided_slice %31 {offsets = [0, 130], sizes = [16, 128], strides = [1, 1]} : vector<16x384xf32> to vector<16x128xf32>
    %35 = vector.extract_strided_slice %31 {offsets = [0, 126], sizes = [16, 128], strides = [1, 1]} : vector<16x384xf32> to vector<16x128xf32>
    %36 = vector.extract_strided_slice %31 {offsets = [0, 130], sizes = [16, 128], strides = [1, 1]} : vector<16x384xf32> to vector<16x128xf32>
    %37 = tpu.concatenate %33, %32, %34, %35, %36 in 0 : vector<16x128xf32>, vector<16x128xf32>, vector<16x128xf32>, vector<16x128xf32>, vector<16x128xf32> -> vector<80x128xf32>
    %c1 = arith.constant 1 : index
    %c0_25 = arith.constant 0 : index
    %c0_26 = arith.constant 0 : index
    %38 = vector.load %arg4[%c1, %c0_25, %c0_26] : memref<3x16x80xbf16, #tpu.memory_space<vmem>>, vector<1x16x80xbf16>
    %39 = vector.shape_cast %38 : vector<1x16x80xbf16> to vector<16x80xbf16>
    %40 = arith.truncf %37 : vector<80x128xf32> to vector<80x128xbf16>
    %cst_27 = arith.constant dense<0.000000e+00> : vector<16x128xf32>
    %41 = tpu.matmul %39, %40, %cst_27 {dimension_numbers = #tpu.dot_dimension_numbers<[1], [0], [0], [1], [0, 0, 1, 1], [], []>} : vector<16x80xbf16>, vector<80x128xbf16>, vector<16x128xf32> -> vector<16x128xf32>
    %c1_28 = arith.constant 1 : index
    %c0_29 = arith.constant 0 : index
    %c0_30 = arith.constant 0 : index
    %42 = vector.load %arg5[%c1_28, %c0_29, %c0_30] : memref<3x16x1xf32, #tpu.memory_space<vmem>>, vector<1x16x1xf32>
    %43 = vector.shape_cast %42 : vector<1x16x1xf32> to vector<16x1xf32>
    %44 = vector.broadcast %43 : vector<16x1xf32> to vector<16x128xf32>
    %45 = arith.addf %41, %44 : vector<16x128xf32>
    %cst_31 = arith.constant 0.000000e+00 : f32
    %46 = vector.broadcast %cst_31 : f32 to vector<16x128xf32>
    %47 = arith.maximumf %45, %46 : vector<16x128xf32>
    %48 = arith.addf %47, %32 : vector<16x128xf32>
    %c0_32 = arith.constant 0 : index
    %c128_33 = arith.constant 128 : index
    %49 = vector.load %arg17[%c0_32, %c128_33] : memref<16x384xf32, #tpu.memory_space<vmem>>, vector<16x128xf32>
    tpu.vector_store %arg17[%c0_32, %c128_33], %48 {strides = array<i32>} : memref<16x384xf32, #tpu.memory_space<vmem>>, vector<16x128xf32>,
    %c0_34 = arith.constant 0 : index
    %c0_35 = arith.constant 0 : index
    %50 = vector.load %arg17[%c0_34, %c0_35] : memref<16x384xf32, #tpu.memory_space<vmem>>, vector<16x384xf32>
    %51 = vector.extract_strided_slice %50 {offsets = [0, 128], sizes = [16, 128], strides = [1, 1]} : vector<16x384xf32> to vector<16x128xf32>
    %52 = vector.extract_strided_slice %50 {offsets = [0, 127], sizes = [16, 128], strides = [1, 1]} : vector<16x384xf32> to vector<16x128xf32>
    %53 = vector.extract_strided_slice %50 {offsets = [0, 129], sizes = [16, 128], strides = [1, 1]} : vector<16x384xf32> to vector<16x128xf32>
    %54 = vector.extract_strided_slice %50 {offsets = [0, 124], sizes = [16, 128], strides = [1, 1]} : vector<16x384xf32> to vector<16x128xf32>
    %55 = vector.extract_strided_slice %50 {offsets = [0, 132], sizes = [16, 128], strides = [1, 1]} : vector<16x384xf32> to vector<16x128xf32>
    %56 = tpu.concatenate %52, %51, %53, %54, %55 in 0 : vector<16x128xf32>, vector<16x128xf32>, vector<16x128xf32>, vector<16x128xf32>, vector<16x128xf32> -> vector<80x128xf32>
    %c2 = arith.constant 2 : index
    %c0_36 = arith.constant 0 : index
    %c0_37 = arith.constant 0 : index
    %57 = vector.load %arg4[%c2, %c0_36, %c0_37] : memref<3x16x80xbf16, #tpu.memory_space<vmem>>, vector<1x16x80xbf16>
    %58 = vector.shape_cast %57 : vector<1x16x80xbf16> to vector<16x80xbf16>
    %59 = arith.truncf %56 : vector<80x128xf32> to vector<80x128xbf16>
    %cst_38 = arith.constant dense<0.000000e+00> : vector<16x128xf32>
    %60 = tpu.matmul %58, %59, %cst_38 {dimension_numbers = #tpu.dot_dimension_numbers<[1], [0], [0], [1], [0, 0, 1, 1], [], []>} : vector<16x80xbf16>, vector<80x128xbf16>, vector<16x128xf32> -> vector<16x128xf32>
    %c2_39 = arith.constant 2 : index
    %c0_40 = arith.constant 0 : index
    %c0_41 = arith.constant 0 : index
    %61 = vector.load %arg5[%c2_39, %c0_40, %c0_41] : memref<3x16x1xf32, #tpu.memory_space<vmem>>, vector<1x16x1xf32>
    %62 = vector.shape_cast %61 : vector<1x16x1xf32> to vector<16x1xf32>
    %63 = vector.broadcast %62 : vector<16x1xf32> to vector<16x128xf32>
    %64 = arith.addf %60, %63 : vector<16x128xf32>
    %cst_42 = arith.constant 0.000000e+00 : f32
    %65 = vector.broadcast %cst_42 : f32 to vector<16x128xf32>
    %66 = arith.maximumf %64, %65 : vector<16x128xf32>
    %67 = arith.addf %66, %51 : vector<16x128xf32>
    %c0_43 = arith.constant 0 : index
    %c128_44 = arith.constant 128 : index
    %68 = vector.load %arg17[%c0_43, %c128_44] : memref<16x384xf32, #tpu.memory_space<vmem>>, vector<16x128xf32>
    tpu.vector_store %arg17[%c0_43, %c128_44], %67 {strides = array<i32>} : memref<16x384xf32, #tpu.memory_space<vmem>>, vector<16x128xf32>,
    %c0_45 = arith.constant 0 : index
    %c0_46 = arith.constant 0 : index
    %69 = vector.load %arg6[%c0_45, %c0_46] : memref<8x16xbf16, #tpu.memory_space<vmem>>, vector<8x16xbf16>
    %c0_47 = arith.constant 0 : index
    %c128_48 = arith.constant 128 : index
    %70 = vector.load %arg17[%c0_47, %c128_48] : memref<16x384xf32, #tpu.memory_space<vmem>>, vector<16x128xf32>
    %71 = arith.truncf %70 : vector<16x128xf32> to vector<16x128xbf16>
    %cst_49 = arith.constant dense<0.000000e+00> : vector<8x128xf32>
    %72 = tpu.matmul %69, %71, %cst_49 {dimension_numbers = #tpu.dot_dimension_numbers<[1], [0], [0], [1], [0, 0, 1, 1], [], []>} : vector<8x16xbf16>, vector<16x128xbf16>, vector<8x128xf32> -> vector<8x128xf32>
    %c0_50 = arith.constant 0 : index
    %c0_51 = arith.constant 0 : index
    %73 = vector.load %arg7[%c0_50, %c0_51] : memref<8x1xf32, #tpu.memory_space<vmem>>, vector<8x1xf32>
    %74 = vector.broadcast %73 : vector<8x1xf32> to vector<8x128xf32>
    %75 = arith.addf %72, %74 : vector<8x128xf32>
    %c0_52 = arith.constant 0 : index
    %c0_53 = arith.constant 0 : index
    %c0_54 = arith.constant 0 : index
    %c0_55 = arith.constant 0 : index
    %76 = vector.load %arg16[%c0_52, %c0_53, %c0_54, %c0_55] : memref<3x1x8x128xf32, #tpu.memory_space<vmem>>, vector<1x1x8x128xf32>
    %77 = vector.shape_cast %76 : vector<1x1x8x128xf32> to vector<8x128xf32>
    %78 = vector.shape_cast %75 : vector<8x128xf32> to vector<1x1x8x128xf32>
    tpu.vector_store %arg16[%c0_52, %c0_53, %c0_54, %c0_55], %78 {strides = array<i32>} : memref<3x1x8x128xf32, #tpu.memory_space<vmem>>, vector<1x1x8x128xf32>,
    %cst_56 = arith.constant dense<0xFF800000> : vector<128xf32>
    %79 = vector.multi_reduction <maximumf>, %75, %cst_56 [0] : vector<8x128xf32> to vector<128xf32>
    %80 = vector.shape_cast %79 : vector<128xf32> to vector<1x128xf32>
    %81 = vector.broadcast %80 : vector<1x128xf32> to vector<8x128xf32>
    %82 = arith.subf %75, %81 : vector<8x128xf32>
    %83 = math.exp %82 : vector<8x128xf32>
    %cst_57 = arith.constant dense<0.000000e+00> : vector<128xf32>
    %84 = vector.multi_reduction <add>, %83, %cst_57 [0] : vector<8x128xf32> to vector<128xf32>
    %85 = vector.shape_cast %84 : vector<128xf32> to vector<1x128xf32>
    %86 = vector.broadcast %85 : vector<1x128xf32> to vector<8x128xf32>
    %87 = arith.divf %83, %86 : vector<8x128xf32>
    %c0_58 = arith.constant 0 : index
    %c0_59 = arith.constant 0 : index
    %c0_60 = arith.constant 0 : index
    %88 = vector.load %arg8[%c0_58, %c0_59, %c0_60] : memref<2x16x8xbf16, #tpu.memory_space<vmem>>, vector<1x16x8xbf16>
    %89 = vector.shape_cast %88 : vector<1x16x8xbf16> to vector<16x8xbf16>
    %90 = arith.truncf %87 : vector<8x128xf32> to vector<8x128xbf16>
    %cst_61 = arith.constant dense<0.000000e+00> : vector<16x128xf32>
    %91 = tpu.matmul %89, %90, %cst_61 {dimension_numbers = #tpu.dot_dimension_numbers<[1], [0], [0], [1], [0, 0, 1, 1], [], []>} : vector<16x8xbf16>, vector<8x128xbf16>, vector<16x128xf32> -> vector<16x128xf32>
    %c0_62 = arith.constant 0 : index
    %c0_63 = arith.constant 0 : index
    %c0_64 = arith.constant 0 : index
    %92 = vector.load %arg9[%c0_62, %c0_63, %c0_64] : memref<2x16x1xf32, #tpu.memory_space<vmem>>, vector<1x16x1xf32>
    %93 = vector.shape_cast %92 : vector<1x16x1xf32> to vector<16x1xf32>
    %94 = vector.broadcast %93 : vector<16x1xf32> to vector<16x128xf32>
    %95 = arith.addf %91, %94 : vector<16x128xf32>
    %c0_65 = arith.constant 0 : index
    %c128_66 = arith.constant 128 : index
    %96 = vector.load %arg17[%c0_65, %c128_66] : memref<16x384xf32, #tpu.memory_space<vmem>>, vector<16x128xf32>
    tpu.vector_store %arg17[%c0_65, %c128_66], %95 {strides = array<i32>} : memref<16x384xf32, #tpu.memory_space<vmem>>, vector<16x128xf32>,
    %c0_67 = arith.constant 0 : index
    %c0_68 = arith.constant 0 : index
    %97 = vector.load %arg17[%c0_67, %c0_68] : memref<16x384xf32, #tpu.memory_space<vmem>>, vector<16x384xf32>
    %98 = vector.extract_strided_slice %97 {offsets = [0, 128], sizes = [16, 128], strides = [1, 1]} : vector<16x384xf32> to vector<16x128xf32>
    %99 = vector.extract_strided_slice %97 {offsets = [0, 127], sizes = [16, 128], strides = [1, 1]} : vector<16x384xf32> to vector<16x128xf32>
    %100 = vector.extract_strided_slice %97 {offsets = [0, 129], sizes = [16, 128], strides = [1, 1]} : vector<16x384xf32> to vector<16x128xf32>
    %101 = tpu.concatenate %99, %98, %100 in 0 : vector<16x128xf32>, vector<16x128xf32>, vector<16x128xf32> -> vector<48x128xf32>
    %c0_69 = arith.constant 0 : index
    %c0_70 = arith.constant 0 : index
    %c0_71 = arith.constant 0 : index
    %c0_72 = arith.constant 0 : index
    %102 = vector.load %arg10[%c0_69, %c0_70, %c0_71, %c0_72] : memref<2x2x16x48xbf16, #tpu.memory_space<vmem>>, vector<1x1x16x48xbf16>
    %103 = vector.shape_cast %102 : vector<1x1x16x48xbf16> to vector<16x48xbf16>
    %104 = arith.truncf %101 : vector<48x128xf32> to vector<48x128xbf16>
    %cst_73 = arith.constant dense<0.000000e+00> : vector<16x128xf32>
    %105 = tpu.matmul %103, %104, %cst_73 {dimension_numbers = #tpu.dot_dimension_numbers<[1], [0], [0], [1], [0, 0, 1, 1], [], []>} : vector<16x48xbf16>, vector<48x128xbf16>, vector<16x128xf32> -> vector<16x128xf32>
    %c0_74 = arith.constant 0 : index
    %c0_75 = arith.constant 0 : index
    %c0_76 = arith.constant 0 : index
    %c0_77 = arith.constant 0 : index
    %106 = vector.load %arg11[%c0_74, %c0_75, %c0_76, %c0_77] : memref<2x2x16x1xf32, #tpu.memory_space<vmem>>, vector<1x1x16x1xf32>
    %107 = vector.shape_cast %106 : vector<1x1x16x1xf32> to vector<16x1xf32>
    %108 = vector.broadcast %107 : vector<16x1xf32> to vector<16x128xf32>
    %109 = arith.addf %105, %108 : vector<16x128xf32>
    %cst_78 = arith.constant 0.000000e+00 : f32
    %110 = vector.broadcast %cst_78 : f32 to vector<16x128xf32>
    %111 = arith.maximumf %109, %110 : vector<16x128xf32>
    %c0_79 = arith.constant 0 : index
    %c0_80 = arith.constant 0 : index
    %c0_81 = arith.constant 0 : index
    %c0_82 = arith.constant 0 : index
    %112 = vector.load %arg12[%c0_79, %c0_80, %c0_81, %c0_82] : memref<2x2x16x16xbf16, #tpu.memory_space<vmem>>, vector<1x1x16x16xbf16>
    %113 = vector.shape_cast %112 : vector<1x1x16x16xbf16> to vector<16x16xbf16>
    %114 = arith.truncf %111 : vector<16x128xf32> to vector<16x128xbf16>
    %cst_83 = arith.constant dense<0.000000e+00> : vector<16x128xf32>
    %115 = tpu.matmul %113, %114, %cst_83 {dimension_numbers = #tpu.dot_dimension_numbers<[1], [0], [0], [1], [0, 0, 1, 1], [], []>} : vector<16x16xbf16>, vector<16x128xbf16>, vector<16x128xf32> -> vector<16x128xf32>
    %116 = arith.addf %98, %115 : vector<16x128xf32>
    %c0_84 = arith.constant 0 : index
    %c0_85 = arith.constant 0 : index
    %c0_86 = arith.constant 0 : index
    %c0_87 = arith.constant 0 : index
    %117 = vector.load %arg13[%c0_84, %c0_85, %c0_86, %c0_87] : memref<2x2x16x1xf32, #tpu.memory_space<vmem>>, vector<1x1x16x1xf32>
    %118 = vector.shape_cast %117 : vector<1x1x16x1xf32> to vector<16x1xf32>
    %119 = vector.broadcast %118 : vector<16x1xf32> to vector<16x128xf32>
    %120 = arith.addf %116, %119 : vector<16x128xf32>
    %c0_88 = arith.constant 0 : index
    %c128_89 = arith.constant 128 : index
    %121 = vector.load %arg17[%c0_88, %c128_89] : memref<16x384xf32, #tpu.memory_space<vmem>>, vector<16x128xf32>
    tpu.vector_store %arg17[%c0_88, %c128_89], %120 {strides = array<i32>} : memref<16x384xf32, #tpu.memory_space<vmem>>, vector<16x128xf32>,
    %c0_90 = arith.constant 0 : index
    %c0_91 = arith.constant 0 : index
    %122 = vector.load %arg17[%c0_90, %c0_91] : memref<16x384xf32, #tpu.memory_space<vmem>>, vector<16x384xf32>
    %123 = vector.extract_strided_slice %122 {offsets = [0, 128], sizes = [16, 128], strides = [1, 1]} : vector<16x384xf32> to vector<16x128xf32>
    %124 = vector.extract_strided_slice %122 {offsets = [0, 126], sizes = [16, 128], strides = [1, 1]} : vector<16x384xf32> to vector<16x128xf32>
    %125 = vector.extract_strided_slice %122 {offsets = [0, 130], sizes = [16, 128], strides = [1, 1]} : vector<16x384xf32> to vector<16x128xf32>
    %126 = tpu.concatenate %124, %123, %125 in 0 : vector<16x128xf32>, vector<16x128xf32>, vector<16x128xf32> -> vector<48x128xf32>
    %c0_92 = arith.constant 0 : index
    %c1_93 = arith.constant 1 : index
    %c0_94 = arith.constant 0 : index
    %c0_95 = arith.constant 0 : index
    %127 = vector.load %arg10[%c0_92, %c1_93, %c0_94, %c0_95] : memref<2x2x16x48xbf16, #tpu.memory_space<vmem>>, vector<1x1x16x48xbf16>
    %128 = vector.shape_cast %127 : vector<1x1x16x48xbf16> to vector<16x48xbf16>
    %129 = arith.truncf %126 : vector<48x128xf32> to vector<48x128xbf16>
    %cst_96 = arith.constant dense<0.000000e+00> : vector<16x128xf32>
    %130 = tpu.matmul %128, %129, %cst_96 {dimension_numbers = #tpu.dot_dimension_numbers<[1], [0], [0], [1], [0, 0, 1, 1], [], []>} : vector<16x48xbf16>, vector<48x128xbf16>, vector<16x128xf32> -> vector<16x128xf32>
    %c0_97 = arith.constant 0 : index
    %c1_98 = arith.constant 1 : index
    %c0_99 = arith.constant 0 : index
    %c0_100 = arith.constant 0 : index
    %131 = vector.load %arg11[%c0_97, %c1_98, %c0_99, %c0_100] : memref<2x2x16x1xf32, #tpu.memory_space<vmem>>, vector<1x1x16x1xf32>
    %132 = vector.shape_cast %131 : vector<1x1x16x1xf32> to vector<16x1xf32>
    %133 = vector.broadcast %132 : vector<16x1xf32> to vector<16x128xf32>
    %134 = arith.addf %130, %133 : vector<16x128xf32>
    %cst_101 = arith.constant 0.000000e+00 : f32
    %135 = vector.broadcast %cst_101 : f32 to vector<16x128xf32>
    %136 = arith.maximumf %134, %135 : vector<16x128xf32>
    %c0_102 = arith.constant 0 : index
    %c1_103 = arith.constant 1 : index
    %c0_104 = arith.constant 0 : index
    %c0_105 = arith.constant 0 : index
    %137 = vector.load %arg12[%c0_102, %c1_103, %c0_104, %c0_105] : memref<2x2x16x16xbf16, #tpu.memory_space<vmem>>, vector<1x1x16x16xbf16>
    %138 = vector.shape_cast %137 : vector<1x1x16x16xbf16> to vector<16x16xbf16>
    %139 = arith.truncf %136 : vector<16x128xf32> to vector<16x128xbf16>
    %cst_106 = arith.constant dense<0.000000e+00> : vector<16x128xf32>
    %140 = tpu.matmul %138, %139, %cst_106 {dimension_numbers = #tpu.dot_dimension_numbers<[1], [0], [0], [1], [0, 0, 1, 1], [], []>} : vector<16x16xbf16>, vector<16x128xbf16>, vector<16x128xf32> -> vector<16x128xf32>
    %141 = arith.addf %123, %140 : vector<16x128xf32>
    %c0_107 = arith.constant 0 : index
    %c1_108 = arith.constant 1 : index
    %c0_109 = arith.constant 0 : index
    %c0_110 = arith.constant 0 : index
    %142 = vector.load %arg13[%c0_107, %c1_108, %c0_109, %c0_110] : memref<2x2x16x1xf32, #tpu.memory_space<vmem>>, vector<1x1x16x1xf32>
    %143 = vector.shape_cast %142 : vector<1x1x16x1xf32> to vector<16x1xf32>
    %144 = vector.broadcast %143 : vector<16x1xf32> to vector<16x128xf32>
    %145 = arith.addf %141, %144 : vector<16x128xf32>
    %c0_111 = arith.constant 0 : index
    %c128_112 = arith.constant 128 : index
    %146 = vector.load %arg17[%c0_111, %c128_112] : memref<16x384xf32, #tpu.memory_space<vmem>>, vector<16x128xf32>
    tpu.vector_store %arg17[%c0_111, %c128_112], %145 {strides = array<i32>} : memref<16x384xf32, #tpu.memory_space<vmem>>, vector<16x128xf32>,
    %c0_113 = arith.constant 0 : index
    %c0_114 = arith.constant 0 : index
    %c0_115 = arith.constant 0 : index
    %147 = vector.load %arg14[%c0_113, %c0_114, %c0_115] : memref<2x8x16xbf16, #tpu.memory_space<vmem>>, vector<1x8x16xbf16>
    %148 = vector.shape_cast %147 : vector<1x8x16xbf16> to vector<8x16xbf16>
    %c0_116 = arith.constant 0 : index
    %c128_117 = arith.constant 128 : index
    %149 = vector.load %arg17[%c0_116, %c128_117] : memref<16x384xf32, #tpu.memory_space<vmem>>, vector<16x128xf32>
    %150 = arith.truncf %149 : vector<16x128xf32> to vector<16x128xbf16>
    %cst_118 = arith.constant dense<0.000000e+00> : vector<8x128xf32>
    %151 = tpu.matmul %148, %150, %cst_118 {dimension_numbers = #tpu.dot_dimension_numbers<[1], [0], [0], [1], [0, 0, 1, 1], [], []>} : vector<8x16xbf16>, vector<16x128xbf16>, vector<8x128xf32> -> vector<8x128xf32>
    %c0_119 = arith.constant 0 : index
    %c0_120 = arith.constant 0 : index
    %c0_121 = arith.constant 0 : index
    %152 = vector.load %arg15[%c0_119, %c0_120, %c0_121] : memref<2x8x1xf32, #tpu.memory_space<vmem>>, vector<1x8x1xf32>
    %153 = vector.shape_cast %152 : vector<1x8x1xf32> to vector<8x1xf32>
    %154 = vector.broadcast %153 : vector<8x1xf32> to vector<8x128xf32>
    %155 = arith.addf %151, %154 : vector<8x128xf32>
    %c1_122 = arith.constant 1 : index
    %c0_123 = arith.constant 0 : index
    %c0_124 = arith.constant 0 : index
    %c0_125 = arith.constant 0 : index
    %156 = vector.load %arg16[%c1_122, %c0_123, %c0_124, %c0_125] : memref<3x1x8x128xf32, #tpu.memory_space<vmem>>, vector<1x1x8x128xf32>
    %157 = vector.shape_cast %156 : vector<1x1x8x128xf32> to vector<8x128xf32>
    %158 = vector.shape_cast %155 : vector<8x128xf32> to vector<1x1x8x128xf32>
    tpu.vector_store %arg16[%c1_122, %c0_123, %c0_124, %c0_125], %158 {strides = array<i32>} : memref<3x1x8x128xf32, #tpu.memory_space<vmem>>, vector<1x1x8x128xf32>,
    %cst_126 = arith.constant dense<0xFF800000> : vector<128xf32>
    %159 = vector.multi_reduction <maximumf>, %155, %cst_126 [0] : vector<8x128xf32> to vector<128xf32>
    %160 = vector.shape_cast %159 : vector<128xf32> to vector<1x128xf32>
    %161 = vector.broadcast %160 : vector<1x128xf32> to vector<8x128xf32>
    %162 = arith.subf %155, %161 : vector<8x128xf32>
    %163 = math.exp %162 : vector<8x128xf32>
    %cst_127 = arith.constant dense<0.000000e+00> : vector<128xf32>
    %164 = vector.multi_reduction <add>, %163, %cst_127 [0] : vector<8x128xf32> to vector<128xf32>
    %165 = vector.shape_cast %164 : vector<128xf32> to vector<1x128xf32>
    %166 = vector.broadcast %165 : vector<1x128xf32> to vector<8x128xf32>
    %167 = arith.divf %163, %166 : vector<8x128xf32>
    %c1_128 = arith.constant 1 : index
    %c0_129 = arith.constant 0 : index
    %c0_130 = arith.constant 0 : index
    %168 = vector.load %arg8[%c1_128, %c0_129, %c0_130] : memref<2x16x8xbf16, #tpu.memory_space<vmem>>, vector<1x16x8xbf16>
    %169 = vector.shape_cast %168 : vector<1x16x8xbf16> to vector<16x8xbf16>
    %170 = arith.truncf %167 : vector<8x128xf32> to vector<8x128xbf16>
    %cst_131 = arith.constant dense<0.000000e+00> : vector<16x128xf32>
    %171 = tpu.matmul %169, %170, %cst_131 {dimension_numbers = #tpu.dot_dimension_numbers<[1], [0], [0], [1], [0, 0, 1, 1], [], []>} : vector<16x8xbf16>, vector<8x128xbf16>, vector<16x128xf32> -> vector<16x128xf32>
    %c1_132 = arith.constant 1 : index
    %c0_133 = arith.constant 0 : index
    %c0_134 = arith.constant 0 : index
    %172 = vector.load %arg9[%c1_132, %c0_133, %c0_134] : memref<2x16x1xf32, #tpu.memory_space<vmem>>, vector<1x16x1xf32>
    %173 = vector.shape_cast %172 : vector<1x16x1xf32> to vector<16x1xf32>
    %174 = vector.broadcast %173 : vector<16x1xf32> to vector<16x128xf32>
    %175 = arith.addf %171, %174 : vector<16x128xf32>
    %c0_135 = arith.constant 0 : index
    %c128_136 = arith.constant 128 : index
    %176 = vector.load %arg17[%c0_135, %c128_136] : memref<16x384xf32, #tpu.memory_space<vmem>>, vector<16x128xf32>
    tpu.vector_store %arg17[%c0_135, %c128_136], %175 {strides = array<i32>} : memref<16x384xf32, #tpu.memory_space<vmem>>, vector<16x128xf32>,
    %c0_137 = arith.constant 0 : index
    %c0_138 = arith.constant 0 : index
    %177 = vector.load %arg17[%c0_137, %c0_138] : memref<16x384xf32, #tpu.memory_space<vmem>>, vector<16x384xf32>
    %178 = vector.extract_strided_slice %177 {offsets = [0, 128], sizes = [16, 128], strides = [1, 1]} : vector<16x384xf32> to vector<16x128xf32>
    %179 = vector.extract_strided_slice %177 {offsets = [0, 127], sizes = [16, 128], strides = [1, 1]} : vector<16x384xf32> to vector<16x128xf32>
    %180 = vector.extract_strided_slice %177 {offsets = [0, 129], sizes = [16, 128], strides = [1, 1]} : vector<16x384xf32> to vector<16x128xf32>
    %181 = tpu.concatenate %179, %178, %180 in 0 : vector<16x128xf32>, vector<16x128xf32>, vector<16x128xf32> -> vector<48x128xf32>
    %c1_139 = arith.constant 1 : index
    %c0_140 = arith.constant 0 : index
    %c0_141 = arith.constant 0 : index
    %c0_142 = arith.constant 0 : index
    %182 = vector.load %arg10[%c1_139, %c0_140, %c0_141, %c0_142] : memref<2x2x16x48xbf16, #tpu.memory_space<vmem>>, vector<1x1x16x48xbf16>
    %183 = vector.shape_cast %182 : vector<1x1x16x48xbf16> to vector<16x48xbf16>
    %184 = arith.truncf %181 : vector<48x128xf32> to vector<48x128xbf16>
    %cst_143 = arith.constant dense<0.000000e+00> : vector<16x128xf32>
    %185 = tpu.matmul %183, %184, %cst_143 {dimension_numbers = #tpu.dot_dimension_numbers<[1], [0], [0], [1], [0, 0, 1, 1], [], []>} : vector<16x48xbf16>, vector<48x128xbf16>, vector<16x128xf32> -> vector<16x128xf32>
    %c1_144 = arith.constant 1 : index
    %c0_145 = arith.constant 0 : index
    %c0_146 = arith.constant 0 : index
    %c0_147 = arith.constant 0 : index
    %186 = vector.load %arg11[%c1_144, %c0_145, %c0_146, %c0_147] : memref<2x2x16x1xf32, #tpu.memory_space<vmem>>, vector<1x1x16x1xf32>
    %187 = vector.shape_cast %186 : vector<1x1x16x1xf32> to vector<16x1xf32>
    %188 = vector.broadcast %187 : vector<16x1xf32> to vector<16x128xf32>
    %189 = arith.addf %185, %188 : vector<16x128xf32>
    %cst_148 = arith.constant 0.000000e+00 : f32
    %190 = vector.broadcast %cst_148 : f32 to vector<16x128xf32>
    %191 = arith.maximumf %189, %190 : vector<16x128xf32>
    %c1_149 = arith.constant 1 : index
    %c0_150 = arith.constant 0 : index
    %c0_151 = arith.constant 0 : index
    %c0_152 = arith.constant 0 : index
    %192 = vector.load %arg12[%c1_149, %c0_150, %c0_151, %c0_152] : memref<2x2x16x16xbf16, #tpu.memory_space<vmem>>, vector<1x1x16x16xbf16>
    %193 = vector.shape_cast %192 : vector<1x1x16x16xbf16> to vector<16x16xbf16>
    %194 = arith.truncf %191 : vector<16x128xf32> to vector<16x128xbf16>
    %cst_153 = arith.constant dense<0.000000e+00> : vector<16x128xf32>
    %195 = tpu.matmul %193, %194, %cst_153 {dimension_numbers = #tpu.dot_dimension_numbers<[1], [0], [0], [1], [0, 0, 1, 1], [], []>} : vector<16x16xbf16>, vector<16x128xbf16>, vector<16x128xf32> -> vector<16x128xf32>
    %196 = arith.addf %178, %195 : vector<16x128xf32>
    %c1_154 = arith.constant 1 : index
    %c0_155 = arith.constant 0 : index
    %c0_156 = arith.constant 0 : index
    %c0_157 = arith.constant 0 : index
    %197 = vector.load %arg13[%c1_154, %c0_155, %c0_156, %c0_157] : memref<2x2x16x1xf32, #tpu.memory_space<vmem>>, vector<1x1x16x1xf32>
    %198 = vector.shape_cast %197 : vector<1x1x16x1xf32> to vector<16x1xf32>
    %199 = vector.broadcast %198 : vector<16x1xf32> to vector<16x128xf32>
    %200 = arith.addf %196, %199 : vector<16x128xf32>
    %c0_158 = arith.constant 0 : index
    %c128_159 = arith.constant 128 : index
    %201 = vector.load %arg17[%c0_158, %c128_159] : memref<16x384xf32, #tpu.memory_space<vmem>>, vector<16x128xf32>
    tpu.vector_store %arg17[%c0_158, %c128_159], %200 {strides = array<i32>} : memref<16x384xf32, #tpu.memory_space<vmem>>, vector<16x128xf32>,
    %c0_160 = arith.constant 0 : index
    %c0_161 = arith.constant 0 : index
    %202 = vector.load %arg17[%c0_160, %c0_161] : memref<16x384xf32, #tpu.memory_space<vmem>>, vector<16x384xf32>
    %203 = vector.extract_strided_slice %202 {offsets = [0, 128], sizes = [16, 128], strides = [1, 1]} : vector<16x384xf32> to vector<16x128xf32>
    %204 = vector.extract_strided_slice %202 {offsets = [0, 126], sizes = [16, 128], strides = [1, 1]} : vector<16x384xf32> to vector<16x128xf32>
    %205 = vector.extract_strided_slice %202 {offsets = [0, 130], sizes = [16, 128], strides = [1, 1]} : vector<16x384xf32> to vector<16x128xf32>
    %206 = tpu.concatenate %204, %203, %205 in 0 : vector<16x128xf32>, vector<16x128xf32>, vector<16x128xf32> -> vector<48x128xf32>
    %c1_162 = arith.constant 1 : index
    %c1_163 = arith.constant 1 : index
    %c0_164 = arith.constant 0 : index
    %c0_165 = arith.constant 0 : index
    %207 = vector.load %arg10[%c1_162, %c1_163, %c0_164, %c0_165] : memref<2x2x16x48xbf16, #tpu.memory_space<vmem>>, vector<1x1x16x48xbf16>
    %208 = vector.shape_cast %207 : vector<1x1x16x48xbf16> to vector<16x48xbf16>
    %209 = arith.truncf %206 : vector<48x128xf32> to vector<48x128xbf16>
    %cst_166 = arith.constant dense<0.000000e+00> : vector<16x128xf32>
    %210 = tpu.matmul %208, %209, %cst_166 {dimension_numbers = #tpu.dot_dimension_numbers<[1], [0], [0], [1], [0, 0, 1, 1], [], []>} : vector<16x48xbf16>, vector<48x128xbf16>, vector<16x128xf32> -> vector<16x128xf32>
    %c1_167 = arith.constant 1 : index
    %c1_168 = arith.constant 1 : index
    %c0_169 = arith.constant 0 : index
    %c0_170 = arith.constant 0 : index
    %211 = vector.load %arg11[%c1_167, %c1_168, %c0_169, %c0_170] : memref<2x2x16x1xf32, #tpu.memory_space<vmem>>, vector<1x1x16x1xf32>
    %212 = vector.shape_cast %211 : vector<1x1x16x1xf32> to vector<16x1xf32>
    %213 = vector.broadcast %212 : vector<16x1xf32> to vector<16x128xf32>
    %214 = arith.addf %210, %213 : vector<16x128xf32>
    %cst_171 = arith.constant 0.000000e+00 : f32
    %215 = vector.broadcast %cst_171 : f32 to vector<16x128xf32>
    %216 = arith.maximumf %214, %215 : vector<16x128xf32>
    %c1_172 = arith.constant 1 : index
    %c1_173 = arith.constant 1 : index
    %c0_174 = arith.constant 0 : index
    %c0_175 = arith.constant 0 : index
    %217 = vector.load %arg12[%c1_172, %c1_173, %c0_174, %c0_175] : memref<2x2x16x16xbf16, #tpu.memory_space<vmem>>, vector<1x1x16x16xbf16>
    %218 = vector.shape_cast %217 : vector<1x1x16x16xbf16> to vector<16x16xbf16>
    %219 = arith.truncf %216 : vector<16x128xf32> to vector<16x128xbf16>
    %cst_176 = arith.constant dense<0.000000e+00> : vector<16x128xf32>
    %220 = tpu.matmul %218, %219, %cst_176 {dimension_numbers = #tpu.dot_dimension_numbers<[1], [0], [0], [1], [0, 0, 1, 1], [], []>} : vector<16x16xbf16>, vector<16x128xbf16>, vector<16x128xf32> -> vector<16x128xf32>
    %221 = arith.addf %203, %220 : vector<16x128xf32>
    %c1_177 = arith.constant 1 : index
    %c1_178 = arith.constant 1 : index
    %c0_179 = arith.constant 0 : index
    %c0_180 = arith.constant 0 : index
    %222 = vector.load %arg13[%c1_177, %c1_178, %c0_179, %c0_180] : memref<2x2x16x1xf32, #tpu.memory_space<vmem>>, vector<1x1x16x1xf32>
    %223 = vector.shape_cast %222 : vector<1x1x16x1xf32> to vector<16x1xf32>
    %224 = vector.broadcast %223 : vector<16x1xf32> to vector<16x128xf32>
    %225 = arith.addf %221, %224 : vector<16x128xf32>
    %c0_181 = arith.constant 0 : index
    %c128_182 = arith.constant 128 : index
    %226 = vector.load %arg17[%c0_181, %c128_182] : memref<16x384xf32, #tpu.memory_space<vmem>>, vector<16x128xf32>
    tpu.vector_store %arg17[%c0_181, %c128_182], %225 {strides = array<i32>} : memref<16x384xf32, #tpu.memory_space<vmem>>, vector<16x128xf32>,
    %c1_183 = arith.constant 1 : index
    %c0_184 = arith.constant 0 : index
    %c0_185 = arith.constant 0 : index
    %227 = vector.load %arg14[%c1_183, %c0_184, %c0_185] : memref<2x8x16xbf16, #tpu.memory_space<vmem>>, vector<1x8x16xbf16>
    %228 = vector.shape_cast %227 : vector<1x8x16xbf16> to vector<8x16xbf16>
    %c0_186 = arith.constant 0 : index
    %c128_187 = arith.constant 128 : index
    %229 = vector.load %arg17[%c0_186, %c128_187] : memref<16x384xf32, #tpu.memory_space<vmem>>, vector<16x128xf32>
    %230 = arith.truncf %229 : vector<16x128xf32> to vector<16x128xbf16>
    %cst_188 = arith.constant dense<0.000000e+00> : vector<8x128xf32>
    %231 = tpu.matmul %228, %230, %cst_188 {dimension_numbers = #tpu.dot_dimension_numbers<[1], [0], [0], [1], [0, 0, 1, 1], [], []>} : vector<8x16xbf16>, vector<16x128xbf16>, vector<8x128xf32> -> vector<8x128xf32>
    %c1_189 = arith.constant 1 : index
    %c0_190 = arith.constant 0 : index
    %c0_191 = arith.constant 0 : index
    %232 = vector.load %arg15[%c1_189, %c0_190, %c0_191] : memref<2x8x1xf32, #tpu.memory_space<vmem>>, vector<1x8x1xf32>
    %233 = vector.shape_cast %232 : vector<1x8x1xf32> to vector<8x1xf32>
    %234 = vector.broadcast %233 : vector<8x1xf32> to vector<8x128xf32>
    %235 = arith.addf %231, %234 : vector<8x128xf32>
    %c2_192 = arith.constant 2 : index
    %c0_193 = arith.constant 0 : index
    %c0_194 = arith.constant 0 : index
    %c0_195 = arith.constant 0 : index
    %236 = vector.load %arg16[%c2_192, %c0_193, %c0_194, %c0_195] : memref<3x1x8x128xf32, #tpu.memory_space<vmem>>, vector<1x1x8x128xf32>
    %237 = vector.shape_cast %236 : vector<1x1x8x128xf32> to vector<8x128xf32>
    %238 = vector.shape_cast %235 : vector<8x128xf32> to vector<1x1x8x128xf32>
    tpu.vector_store %arg16[%c2_192, %c0_193, %c0_194, %c0_195], %238 {strides = array<i32>} : memref<3x1x8x128xf32, #tpu.memory_space<vmem>>, vector<1x1x8x128xf32>,
    return
  }
  func.func @transform_0(%arg0: i32) -> (i32, i32, i32) {
    %c0_i32 = arith.constant 0 : i32
    %c0_i32_0 = arith.constant 0 : i32
    %c0_i32_1 = arith.constant 0 : i32
    return %arg0, %c0_i32, %c0_i32_0 : i32, i32, i32
  }
  func.func @transform_1(%arg0: i32) -> (i32, i32) {
    %c0_i32 = arith.constant 0 : i32
    %c0_i32_0 = arith.constant 0 : i32
    %c0_i32_1 = arith.constant 0 : i32
    return %c0_i32, %c0_i32_0 : i32, i32
  }
  func.func @transform_2(%arg0: i32) -> (i32, i32) {
    %c0_i32 = arith.constant 0 : i32
    %c0_i32_0 = arith.constant 0 : i32
    %c0_i32_1 = arith.constant 0 : i32
    return %c0_i32, %c0_i32_0 : i32, i32
  }
  func.func @transform_3(%arg0: i32) -> (i32, i32, i32) {
    %c0_i32 = arith.constant 0 : i32
    %c0_i32_0 = arith.constant 0 : i32
    %c0_i32_1 = arith.constant 0 : i32
    %c0_i32_2 = arith.constant 0 : i32
    return %c0_i32, %c0_i32_0, %c0_i32_1 : i32, i32, i32
  }
  func.func @transform_4(%arg0: i32) -> (i32, i32, i32) {
    %c0_i32 = arith.constant 0 : i32
    %c0_i32_0 = arith.constant 0 : i32
    %c0_i32_1 = arith.constant 0 : i32
    %c0_i32_2 = arith.constant 0 : i32
    return %c0_i32, %c0_i32_0, %c0_i32_1 : i32, i32, i32
  }
  func.func @transform_5(%arg0: i32) -> (i32, i32) {
    %c0_i32 = arith.constant 0 : i32
    %c0_i32_0 = arith.constant 0 : i32
    %c0_i32_1 = arith.constant 0 : i32
    return %c0_i32, %c0_i32_0 : i32, i32
  }
  func.func @transform_6(%arg0: i32) -> (i32, i32) {
    %c0_i32 = arith.constant 0 : i32
    %c0_i32_0 = arith.constant 0 : i32
    %c0_i32_1 = arith.constant 0 : i32
    return %c0_i32, %c0_i32_0 : i32, i32
  }
  func.func @transform_7(%arg0: i32) -> (i32, i32, i32) {
    %c0_i32 = arith.constant 0 : i32
    %c0_i32_0 = arith.constant 0 : i32
    %c0_i32_1 = arith.constant 0 : i32
    %c0_i32_2 = arith.constant 0 : i32
    return %c0_i32, %c0_i32_0, %c0_i32_1 : i32, i32, i32
  }
  func.func @transform_8(%arg0: i32) -> (i32, i32, i32) {
    %c0_i32 = arith.constant 0 : i32
    %c0_i32_0 = arith.constant 0 : i32
    %c0_i32_1 = arith.constant 0 : i32
    %c0_i32_2 = arith.constant 0 : i32
    return %c0_i32, %c0_i32_0, %c0_i32_1 : i32, i32, i32
  }
  func.func @transform_9(%arg0: i32) -> (i32, i32, i32, i32) {
    %c0_i32 = arith.constant 0 : i32
    %c0_i32_0 = arith.constant 0 : i32
    %c0_i32_1 = arith.constant 0 : i32
    %c0_i32_2 = arith.constant 0 : i32
    %c0_i32_3 = arith.constant 0 : i32
    return %c0_i32, %c0_i32_0, %c0_i32_1, %c0_i32_2 : i32, i32, i32, i32
  }
  func.func @transform_10(%arg0: i32) -> (i32, i32, i32, i32) {
    %c0_i32 = arith.constant 0 : i32
    %c0_i32_0 = arith.constant 0 : i32
    %c0_i32_1 = arith.constant 0 : i32
    %c0_i32_2 = arith.constant 0 : i32
    %c0_i32_3 = arith.constant 0 : i32
    return %c0_i32, %c0_i32_0, %c0_i32_1, %c0_i32_2 : i32, i32, i32, i32
  }
  func.func @transform_11(%arg0: i32) -> (i32, i32, i32, i32) {
    %c0_i32 = arith.constant 0 : i32
    %c0_i32_0 = arith.constant 0 : i32
    %c0_i32_1 = arith.constant 0 : i32
    %c0_i32_2 = arith.constant 0 : i32
    %c0_i32_3 = arith.constant 0 : i32
    return %c0_i32, %c0_i32_0, %c0_i32_1, %c0_i32_2 : i32, i32, i32, i32
  }
  func.func @transform_12(%arg0: i32) -> (i32, i32, i32, i32) {
    %c0_i32 = arith.constant 0 : i32
    %c0_i32_0 = arith.constant 0 : i32
    %c0_i32_1 = arith.constant 0 : i32
    %c0_i32_2 = arith.constant 0 : i32
    %c0_i32_3 = arith.constant 0 : i32
    return %c0_i32, %c0_i32_0, %c0_i32_1, %c0_i32_2 : i32, i32, i32, i32
  }
  func.func @transform_13(%arg0: i32) -> (i32, i32, i32) {
    %c0_i32 = arith.constant 0 : i32
    %c0_i32_0 = arith.constant 0 : i32
    %c0_i32_1 = arith.constant 0 : i32
    %c0_i32_2 = arith.constant 0 : i32
    return %c0_i32, %c0_i32_0, %c0_i32_1 : i32, i32, i32
  }
  func.func @transform_14(%arg0: i32) -> (i32, i32, i32) {
    %c0_i32 = arith.constant 0 : i32
    %c0_i32_0 = arith.constant 0 : i32
    %c0_i32_1 = arith.constant 0 : i32
    %c0_i32_2 = arith.constant 0 : i32
    return %c0_i32, %c0_i32_0, %c0_i32_1 : i32, i32, i32
  }
  func.func @transform_15(%arg0: i32) -> (i32, i32, i32, i32) {
    %c0_i32 = arith.constant 0 : i32
    %c0_i32_0 = arith.constant 0 : i32
    %c0_i32_1 = arith.constant 0 : i32
    %c0_i32_2 = arith.constant 0 : i32
    return %c0_i32, %arg0, %c0_i32_0, %c0_i32_1 : i32, i32, i32, i32
  }
}

</mosaic_0001>

<llo_original>
// kernel: tpu_custom_call.1
$region0: #{tpu_custom_call.1}
  #allocation0 [shape = 'u32[]', space=smem, size = 0x4, offset = 0x4, fixed_abs, tag = 'smem constant byte address 0x4 - core index']
  #allocation1 [shape = 'u32[144,128]{1,0:T(1,128)}', space=vmem, size = 0x12000, scoped, tag = 'internal scratch']
  #allocation2 [shape = 'f32[16,384]{1,0:T(8,128)}', space=vmem, size = 0x6000, scoped, tag = 'scratch operand']
  %s0 = inlined_call_operand.vmem [shape: f32[2,8,128], index: 0, kind: input, shape index: {}]
  %s1 = inlined_call_operand.vmem [shape: bf16[16,8], index: 1, kind: input, shape index: {}]
  %s2 = inlined_call_operand.vmem [shape: f32[16,1], index: 2, kind: input, shape index: {}]
  %s3 = inlined_call_operand.vmem [shape: bf16[3,16,80], index: 3, kind: input, shape index: {}]
  %s4 = inlined_call_operand.vmem [shape: f32[3,16,1], index: 4, kind: input, shape index: {}]
  %s5 = inlined_call_operand.vmem [shape: bf16[8,16], index: 5, kind: input, shape index: {}]
  %s6 = inlined_call_operand.vmem [shape: f32[8,1], index: 6, kind: input, shape index: {}]
  %s7 = inlined_call_operand.vmem [shape: bf16[2,16,8], index: 7, kind: input, shape index: {}]
  %s8 = inlined_call_operand.vmem [shape: f32[2,16,1], index: 8, kind: input, shape index: {}]
  %s9 = inlined_call_operand.vmem [shape: bf16[2,2,16,48], index: 9, kind: input, shape index: {}]
  %s10 = inlined_call_operand.vmem [shape: f32[2,2,16,1], index: 10, kind: input, shape index: {}]
  %s11 = inlined_call_operand.vmem [shape: bf16[2,2,16,16], index: 11, kind: input, shape index: {}]
  %s12 = inlined_call_operand.vmem [shape: f32[2,2,16,1], index: 12, kind: input, shape index: {}]
  %s13 = inlined_call_operand.vmem [shape: bf16[2,8,16], index: 13, kind: input, shape index: {}]
  %s14 = inlined_call_operand.vmem [shape: f32[2,8,1], index: 14, kind: input, shape index: {}]
  %s15 = inlined_call_operand.hbm [shape: f32[3,2,8,128], index: 15, kind: output, shape index: {}]
  %s16 = sld [smem:[#allocation0]]
  $region93: #{tpu_custom_call.1} parent=0
    _
  %s18 = ssub.s32 1, %s16
  %s19 = scalar_select 0, %s18, %s16
  $region1: #{tpu_custom_call.1} parent=0
    #allocation3 [shape = 'u8[24576]{0}', space=vmem, size = 0x6000, scoped, tag = 'output window, operand 0']
    #allocation4 [shape = 's32[2]{0}', space=sflag, size = 0x8, scoped, tag = 'scoped memory for tpu_custom_call.1']
    %20 = vsyncpa [#allocation4], 0
    %s21 = scalar_lea.sflag [#allocation4], 1
    %22 = vsyncpa %s21, 0
    loop: start=0, step=1, limit=4
    $region2: #{tpu_custom_call.1} parent=1 // loop_pre_header
      _
    $region3: #{tpu_custom_call.1} parent=1 // loop_header
      %s24 = sphi 0, %s28
      %p25 = scmp.ge.s32.totalorder %s24, 4
      %s34 = sphi 0, %s36
      %s37 = sphi 0, %s34
      %s38 = sphi 0, %s37
      %s54 = sphi 0, %s38
      %s58 = sphi 0, %s58
      %s60 = sphi 0, %s58
      %s61 = sphi 0, %s60
      %s75 = sphi 0, %s61
      %s79 = sphi 0, %s79
      %s81 = sphi 0, %s79
      %s82 = sphi 0, %s81
      %s96 = sphi 0, %s82
      %s100 = sphi 0, %s100
      %s102 = sphi 0, %s100
      %s103 = sphi 0, %s102
      %s117 = sphi 0, %s103
      %s121 = sphi 0, %s121
      %s123 = sphi 0, %s121
      %s124 = sphi 0, %s123
      %s138 = sphi 0, %s124
      %s142 = sphi 0, %s142
      %s144 = sphi 0, %s142
      %s145 = sphi 0, %s144
      %s159 = sphi 0, %s145
      %s163 = sphi 0, %s163
      %s165 = sphi 0, %s163
      %s166 = sphi 0, %s165
      %s180 = sphi 0, %s166
      %s184 = sphi 0, %s184
      %s186 = sphi 0, %s184
      %s187 = sphi 0, %s186
      %s201 = sphi 0, %s187
      %s205 = sphi 0, %s205
      %s207 = sphi 0, %s205
      %s208 = sphi 0, %s207
      %s222 = sphi 0, %s208
      %s226 = sphi 0, %s226
      %s228 = sphi 0, %s226
      %s229 = sphi 0, %s228
      %s243 = sphi 0, %s229
      %s247 = sphi 0, %s247
      %s249 = sphi 0, %s247
      %s250 = sphi 0, %s249
      %s264 = sphi 0, %s250
      %s268 = sphi 0, %s268
      %s270 = sphi 0, %s268
      %s271 = sphi 0, %s270
      %s285 = sphi 0, %s271
      %s289 = sphi 0, %s289
      %s291 = sphi 0, %s289
      %s292 = sphi 0, %s291
      %s306 = sphi 0, %s292
      %s310 = sphi 0, %s310
      %s312 = sphi 0, %s310
      %s313 = sphi 0, %s312
      %s327 = sphi 0, %s313
      %s331 = sphi 0, %s331
      %s333 = sphi 0, %s331
      %s334 = sphi 0, %s333
      %s348 = sphi 0, %s334
      %s354 = sphi 0, %s356
      %s357 = sphi 0, %s354
      %s358 = sphi 0, %s357
      %s374 = sphi 0, %s358
    $region4: #{tpu_custom_call.1} parent=1 // loop_header_branch
      %27 = sbr.rel (%p25) target = $region8
    $region5: #{tpu_custom_call.1} parent=1 // loop_body
      %s29 = ssub.s32 %s24, 1
      %s30 = ssub.s32 %s24, 2
      %s31 = sadd.s32 %s24, 1
      %s32 = ssub.s32 %s24, %s31
      %p33 = scmp.eq.s32.totalorder %s32, 0
      %s35 = sadd.s32 %s34, 1
      %s36 = scalar_select %p33, %s34, %s35
      %p39 = pneg %p33
      %p40 = scmp.eq.s32.totalorder %s24, 1
      %p41 = por %p39, %p40
      %p42 = scmp.ne.s32.totalorder %s34, %s37
      %p43 = scmp.eq.s32.totalorder %s24, 0
      %p44 = por %p42, %p43
      %p45 = scmp.ne.s32.totalorder %s34, %s37
      %p46 = scmp.eq.s32.totalorder %s29, 1
      %p47 = por %p45, %p46
      %p48 = scmp.ne.s32.totalorder %s37, %s38
      %p49 = scmp.eq.s32.totalorder %s29, 0
      %p50 = por %p48, %p49
      %p51 = scmp.ne.s32.totalorder %s37, %s38
      %p52 = scmp.eq.s32.totalorder %s30, 1
      %p53 = por %p51, %p52
      %p55 = scmp.ne.s32.totalorder %s38, %s54
      %p56 = scmp.eq.s32.totalorder %s30, 0
      %p57 = por %p55, %p56
      %s59 = sadd.s32 %s58, 1
      %p62 = scmp.eq.s32.totalorder %s24, 1
      %p63 = scmp.ne.s32.totalorder %s58, %s60
      %p64 = scmp.eq.s32.totalorder %s24, 0
      %p65 = por %p63, %p64
      %p66 = scmp.ne.s32.totalorder %s58, %s60
      %p67 = scmp.eq.s32.totalorder %s29, 1
      %p68 = por %p66, %p67
      %p69 = scmp.ne.s32.totalorder %s60, %s61
      %p70 = scmp.eq.s32.totalorder %s29, 0
      %p71 = por %p69, %p70
      %p72 = scmp.ne.s32.totalorder %s60, %s61
      %p73 = scmp.eq.s32.totalorder %s30, 1
      %p74 = por %p72, %p73
      %p76 = scmp.ne.s32.totalorder %s61, %s75
      %p77 = scmp.eq.s32.totalorder %s30, 0
      %p78 = por %p76, %p77
      %s80 = sadd.s32 %s79, 1
      %p83 = scmp.eq.s32.totalorder %s24, 1
      %p84 = scmp.ne.s32.totalorder %s79, %s81
      %p85 = scmp.eq.s32.totalorder %s24, 0
      %p86 = por %p84, %p85
      %p87 = scmp.ne.s32.totalorder %s79, %s81
      %p88 = scmp.eq.s32.totalorder %s29, 1
      %p89 = por %p87, %p88
      %p90 = scmp.ne.s32.totalorder %s81, %s82
      %p91 = scmp.eq.s32.totalorder %s29, 0
      %p92 = por %p90, %p91
      %p93 = scmp.ne.s32.totalorder %s81, %s82
      %p94 = scmp.eq.s32.totalorder %s30, 1
      %p95 = por %p93, %p94
      %p97 = scmp.ne.s32.totalorder %s82, %s96
      %p98 = scmp.eq.s32.totalorder %s30, 0
      %p99 = por %p97, %p98
      %s101 = sadd.s32 %s100, 1
      %p104 = scmp.eq.s32.totalorder %s24, 1
      %p105 = scmp.ne.s32.totalorder %s100, %s102
      %p106 = scmp.eq.s32.totalorder %s24, 0
      %p107 = por %p105, %p106
      %p108 = scmp.ne.s32.totalorder %s100, %s102
      %p109 = scmp.eq.s32.totalorder %s29, 1
      %p110 = por %p108, %p109
      %p111 = scmp.ne.s32.totalorder %s102, %s103
      %p112 = scmp.eq.s32.totalorder %s29, 0
      %p113 = por %p111, %p112
      %p114 = scmp.ne.s32.totalorder %s102, %s103
      %p115 = scmp.eq.s32.totalorder %s30, 1
      %p116 = por %p114, %p115
      %p118 = scmp.ne.s32.totalorder %s103, %s117
      %p119 = scmp.eq.s32.totalorder %s30, 0
      %p120 = por %p118, %p119
      %s122 = sadd.s32 %s121, 1
      %p125 = scmp.eq.s32.totalorder %s24, 1
      %p126 = scmp.ne.s32.totalorder %s121, %s123
      %p127 = scmp.eq.s32.totalorder %s24, 0
      %p128 = por %p126, %p127
      %p129 = scmp.ne.s32.totalorder %s121, %s123
      %p130 = scmp.eq.s32.totalorder %s29, 1
      %p131 = por %p129, %p130
      %p132 = scmp.ne.s32.totalorder %s123, %s124
      %p133 = scmp.eq.s32.totalorder %s29, 0
      %p134 = por %p132, %p133
      %p135 = scmp.ne.s32.totalorder %s123, %s124
      %p136 = scmp.eq.s32.totalorder %s30, 1
      %p137 = por %p135, %p136
      %p139 = scmp.ne.s32.totalorder %s124, %s138
      %p140 = scmp.eq.s32.totalorder %s30, 0
      %p141 = por %p139, %p140
      %s143 = sadd.s32 %s142, 1
      %p146 = scmp.eq.s32.totalorder %s24, 1
      %p147 = scmp.ne.s32.totalorder %s142, %s144
      %p148 = scmp.eq.s32.totalorder %s24, 0
      %p149 = por %p147, %p148
      %p150 = scmp.ne.s32.totalorder %s142, %s144
      %p151 = scmp.eq.s32.totalorder %s29, 1
      %p152 = por %p150, %p151
      %p153 = scmp.ne.s32.totalorder %s144, %s145
      %p154 = scmp.eq.s32.totalorder %s29, 0
      %p155 = por %p153, %p154
      %p156 = scmp.ne.s32.totalorder %s144, %s145
      %p157 = scmp.eq.s32.totalorder %s30, 1
      %p158 = por %p156, %p157
      %p160 = scmp.ne.s32.totalorder %s145, %s159
      %p161 = scmp.eq.s32.totalorder %s30, 0
      %p162 = por %p160, %p161
      %s164 = sadd.s32 %s163, 1
      %p167 = scmp.eq.s32.totalorder %s24, 1
      %p168 = scmp.ne.s32.totalorder %s163, %s165
      %p169 = scmp.eq.s32.totalorder %s24, 0
      %p170 = por %p168, %p169
      %p171 = scmp.ne.s32.totalorder %s163, %s165
      %p172 = scmp.eq.s32.totalorder %s29, 1
      %p173 = por %p171, %p172
      %p174 = scmp.ne.s32.totalorder %s165, %s166
      %p175 = scmp.eq.s32.totalorder %s29, 0
      %p176 = por %p174, %p175
      %p177 = scmp.ne.s32.totalorder %s165, %s166
      %p178 = scmp.eq.s32.totalorder %s30, 1
      %p179 = por %p177, %p178
      %p181 = scmp.ne.s32.totalorder %s166, %s180
      %p182 = scmp.eq.s32.totalorder %s30, 0
      %p183 = por %p181, %p182
      %s185 = sadd.s32 %s184, 1
      %p188 = scmp.eq.s32.totalorder %s24, 1
      %p189 = scmp.ne.s32.totalorder %s184, %s186
      %p190 = scmp.eq.s32.totalorder %s24, 0
      %p191 = por %p189, %p190
      %p192 = scmp.ne.s32.totalorder %s184, %s186
      %p193 = scmp.eq.s32.totalorder %s29, 1
      %p194 = por %p192, %p193
      %p195 = scmp.ne.s32.totalorder %s186, %s187
      %p196 = scmp.eq.s32.totalorder %s29, 0
      %p197 = por %p195, %p196
      %p198 = scmp.ne.s32.totalorder %s186, %s187
      %p199 = scmp.eq.s32.totalorder %s30, 1
      %p200 = por %p198, %p199
      %p202 = scmp.ne.s32.totalorder %s187, %s201
      %p203 = scmp.eq.s32.totalorder %s30, 0
      %p204 = por %p202, %p203
      %s206 = sadd.s32 %s205, 1
      %p209 = scmp.eq.s32.totalorder %s24, 1
      %p210 = scmp.ne.s32.totalorder %s205, %s207
      %p211 = scmp.eq.s32.totalorder %s24, 0
      %p212 = por %p210, %p211
      %p213 = scmp.ne.s32.totalorder %s205, %s207
      %p214 = scmp.eq.s32.totalorder %s29, 1
      %p215 = por %p213, %p214
      %p216 = scmp.ne.s32.totalorder %s207, %s208
      %p217 = scmp.eq.s32.totalorder %s29, 0
      %p218 = por %p216, %p217
      %p219 = scmp.ne.s32.totalorder %s207, %s208
      %p220 = scmp.eq.s32.totalorder %s30, 1
      %p221 = por %p219, %p220
      %p223 = scmp.ne.s32.totalorder %s208, %s222
      %p224 = scmp.eq.s32.totalorder %s30, 0
      %p225 = por %p223, %p224
      %s227 = sadd.s32 %s226, 1
      %p230 = scmp.eq.s32.totalorder %s24, 1
      %p231 = scmp.ne.s32.totalorder %s226, %s228
      %p232 = scmp.eq.s32.totalorder %s24, 0
      %p233 = por %p231, %p232
      %p234 = scmp.ne.s32.totalorder %s226, %s228
      %p235 = scmp.eq.s32.totalorder %s29, 1
      %p236 = por %p234, %p235
      %p237 = scmp.ne.s32.totalorder %s228, %s229
      %p238 = scmp.eq.s32.totalorder %s29, 0
      %p239 = por %p237, %p238
      %p240 = scmp.ne.s32.totalorder %s228, %s229
      %p241 = scmp.eq.s32.totalorder %s30, 1
      %p242 = por %p240, %p241
      %p244 = scmp.ne.s32.totalorder %s229, %s243
      %p245 = scmp.eq.s32.totalorder %s30, 0
      %p246 = por %p244, %p245
      %s248 = sadd.s32 %s247, 1
      %p251 = scmp.eq.s32.totalorder %s24, 1
      %p252 = scmp.ne.s32.totalorder %s247, %s249
      %p253 = scmp.eq.s32.totalorder %s24, 0
      %p254 = por %p252, %p253
      %p255 = scmp.ne.s32.totalorder %s247, %s249
      %p256 = scmp.eq.s32.totalorder %s29, 1
      %p257 = por %p255, %p256
      %p258 = scmp.ne.s32.totalorder %s249, %s250
      %p259 = scmp.eq.s32.totalorder %s29, 0
      %p260 = por %p258, %p259
      %p261 = scmp.ne.s32.totalorder %s249, %s250
      %p262 = scmp.eq.s32.totalorder %s30, 1
      %p263 = por %p261, %p262
      %p265 = scmp.ne.s32.totalorder %s250, %s264
      %p266 = scmp.eq.s32.totalorder %s30, 0
      %p267 = por %p265, %p266
      %s269 = sadd.s32 %s268, 1
      %p272 = scmp.eq.s32.totalorder %s24, 1
      %p273 = scmp.ne.s32.totalorder %s268, %s270
      %p274 = scmp.eq.s32.totalorder %s24, 0
      %p275 = por %p273, %p274
      %p276 = scmp.ne.s32.totalorder %s268, %s270
      %p277 = scmp.eq.s32.totalorder %s29, 1
      %p278 = por %p276, %p277
      %p279 = scmp.ne.s32.totalorder %s270, %s271
      %p280 = scmp.eq.s32.totalorder %s29, 0
      %p281 = por %p279, %p280
      %p282 = scmp.ne.s32.totalorder %s270, %s271
      %p283 = scmp.eq.s32.totalorder %s30, 1
      %p284 = por %p282, %p283
      %p286 = scmp.ne.s32.totalorder %s271, %s285
      %p287 = scmp.eq.s32.totalorder %s30, 0
      %p288 = por %p286, %p287
      %s290 = sadd.s32 %s289, 1
      %p293 = scmp.eq.s32.totalorder %s24, 1
      %p294 = scmp.ne.s32.totalorder %s289, %s291
      %p295 = scmp.eq.s32.totalorder %s24, 0
      %p296 = por %p294, %p295
      %p297 = scmp.ne.s32.totalorder %s289, %s291
      %p298 = scmp.eq.s32.totalorder %s29, 1
      %p299 = por %p297, %p298
      %p300 = scmp.ne.s32.totalorder %s291, %s292
      %p301 = scmp.eq.s32.totalorder %s29, 0
      %p302 = por %p300, %p301
      %p303 = scmp.ne.s32.totalorder %s291, %s292
      %p304 = scmp.eq.s32.totalorder %s30, 1
      %p305 = por %p303, %p304
      %p307 = scmp.ne.s32.totalorder %s292, %s306
      %p308 = scmp.eq.s32.totalorder %s30, 0
      %p309 = por %p307, %p308
      %s311 = sadd.s32 %s310, 1
      %p314 = scmp.eq.s32.totalorder %s24, 1
      %p315 = scmp.ne.s32.totalorder %s310, %s312
      %p316 = scmp.eq.s32.totalorder %s24, 0
      %p317 = por %p315, %p316
      %p318 = scmp.ne.s32.totalorder %s310, %s312
      %p319 = scmp.eq.s32.totalorder %s29, 1
      %p320 = por %p318, %p319
      %p321 = scmp.ne.s32.totalorder %s312, %s313
      %p322 = scmp.eq.s32.totalorder %s29, 0
      %p323 = por %p321, %p322
      %p324 = scmp.ne.s32.totalorder %s312, %s313
      %p325 = scmp.eq.s32.totalorder %s30, 1
      %p326 = por %p324, %p325
      %p328 = scmp.ne.s32.totalorder %s313, %s327
      %p329 = scmp.eq.s32.totalorder %s30, 0
      %p330 = por %p328, %p329
      %s332 = sadd.s32 %s331, 1
      %p335 = scmp.eq.s32.totalorder %s24, 1
      %p336 = scmp.ne.s32.totalorder %s331, %s333
      %p337 = scmp.eq.s32.totalorder %s24, 0
      %p338 = por %p336, %p337
      %p339 = scmp.ne.s32.totalorder %s331, %s333
      %p340 = scmp.eq.s32.totalorder %s29, 1
      %p341 = por %p339, %p340
      %p342 = scmp.ne.s32.totalorder %s333, %s334
      %p343 = scmp.eq.s32.totalorder %s29, 0
      %p344 = por %p342, %p343
      %p345 = scmp.ne.s32.totalorder %s333, %s334
      %p346 = scmp.eq.s32.totalorder %s30, 1
      %p347 = por %p345, %p346
      %p349 = scmp.ne.s32.totalorder %s334, %s348
      %p350 = scmp.eq.s32.totalorder %s30, 0
      %p351 = por %p349, %p350
      %s352 = ssub.s32 %s24, %s31
      %p353 = scmp.eq.s32.totalorder %s352, 0
      %s355 = sadd.s32 %s354, 1
      %s356 = scalar_select %p353, %s354, %s355
      %p359 = pneg %p353
      %p360 = scmp.eq.s32.totalorder %s24, 1
      %p361 = por %p359, %p360
      %p362 = scmp.ne.s32.totalorder %s354, %s357
      %p363 = scmp.eq.s32.totalorder %s24, 0
      %p364 = por %p362, %p363
      %p365 = scmp.ne.s32.totalorder %s354, %s357
      %p366 = scmp.eq.s32.totalorder %s29, 1
      %p367 = por %p365, %p366
      %p368 = scmp.ne.s32.totalorder %s357, %s358
      %p369 = scmp.eq.s32.totalorder %s29, 0
      %p370 = por %p368, %p369
      %p371 = scmp.ne.s32.totalorder %s357, %s358
      %p372 = scmp.eq.s32.totalorder %s30, 1
      %p373 = por %p371, %p372
      %p375 = scmp.ne.s32.totalorder %s358, %s374
      %p376 = scmp.eq.s32.totalorder %s30, 0
      %p377 = por %p375, %p376
      %p378 = scmp.le.s32.totalorder 1, %s24
      %p379 = scmp.lt.s32.totalorder %s24, 3
      %p380 = pnand %p378, %p379
      %p381 = pneg %p380
      // Predicated region
      $region9: #{tpu_custom_call.1} parent=5 // pred_check
        _
      $region10: #{tpu_custom_call.1} parent=5 // pred_check_branch
        %383 = sbr.rel (%p380) target = $region12
      $region11: #{tpu_custom_call.1} parent=5 // pred_region
        %s384 = ssub.s32 %s24, 1
        // Predicated region
        $region13: #{tpu_custom_call.1} parent=11 // pred_check
          %p385 = pneg %p71
        $region14: #{tpu_custom_call.1} parent=11 // pred_check_branch
          %387 = sbr.rel (%p385) target = $region16
        $region15: #{tpu_custom_call.1} parent=11 // pred_region
          _
        $region16: #{tpu_custom_call.1} parent=11 // pred_fallthru
          _
        // Predicated region
        $region17: #{tpu_custom_call.1} parent=11 // pred_check
          %p388 = pneg %p92
        $region18: #{tpu_custom_call.1} parent=11 // pred_check_branch
          %390 = sbr.rel (%p388) target = $region20
        $region19: #{tpu_custom_call.1} parent=11 // pred_region
          _
        $region20: #{tpu_custom_call.1} parent=11 // pred_fallthru
          _
        // Predicated region
        $region21: #{tpu_custom_call.1} parent=11 // pred_check
          %p391 = pneg %p113
        $region22: #{tpu_custom_call.1} parent=11 // pred_check_branch
          %393 = sbr.rel (%p391) target = $region24
        $region23: #{tpu_custom_call.1} parent=11 // pred_region
          _
        $region24: #{tpu_custom_call.1} parent=11 // pred_fallthru
          _
        // Predicated region
        $region25: #{tpu_custom_call.1} parent=11 // pred_check
          %p394 = pneg %p134
        $region26: #{tpu_custom_call.1} parent=11 // pred_check_branch
          %396 = sbr.rel (%p394) target = $region28
        $region27: #{tpu_custom_call.1} parent=11 // pred_region
          _
        $region28: #{tpu_custom_call.1} parent=11 // pred_fallthru
          _
        // Predicated region
        $region29: #{tpu_custom_call.1} parent=11 // pred_check
          %p397 = pneg %p155
        $region30: #{tpu_custom_call.1} parent=11 // pred_check_branch
          %399 = sbr.rel (%p397) target = $region32
        $region31: #{tpu_custom_call.1} parent=11 // pred_region
          _
        $region32: #{tpu_custom_call.1} parent=11 // pred_fallthru
          _
        // Predicated region
        $region33: #{tpu_custom_call.1} parent=11 // pred_check
          %p400 = pneg %p176
        $region34: #{tpu_custom_call.1} parent=11 // pred_check_branch
          %402 = sbr.rel (%p400) target = $region36
        $region35: #{tpu_custom_call.1} parent=11 // pred_region
          _
        $region36: #{tpu_custom_call.1} parent=11 // pred_fallthru
          _
        // Predicated region
        $region37: #{tpu_custom_call.1} parent=11 // pred_check
          %p403 = pneg %p197
        $region38: #{tpu_custom_call.1} parent=11 // pred_check_branch
          %405 = sbr.rel (%p403) target = $region40
        $region39: #{tpu_custom_call.1} parent=11 // pred_region
          _
        $region40: #{tpu_custom_call.1} parent=11 // pred_fallthru
          _
        // Predicated region
        $region41: #{tpu_custom_call.1} parent=11 // pred_check
          %p406 = pneg %p218
        $region42: #{tpu_custom_call.1} parent=11 // pred_check_branch
          %408 = sbr.rel (%p406) target = $region44
        $region43: #{tpu_custom_call.1} parent=11 // pred_region
          _
        $region44: #{tpu_custom_call.1} parent=11 // pred_fallthru
          _
        // Predicated region
        $region45: #{tpu_custom_call.1} parent=11 // pred_check
          %p409 = pneg %p239
        $region46: #{tpu_custom_call.1} parent=11 // pred_check_branch
          %411 = sbr.rel (%p409) target = $region48
        $region47: #{tpu_custom_call.1} parent=11 // pred_region
          _
        $region48: #{tpu_custom_call.1} parent=11 // pred_fallthru
          _
        // Predicated region
        $region49: #{tpu_custom_call.1} parent=11 // pred_check
          %p412 = pneg %p260
        $region50: #{tpu_custom_call.1} parent=11 // pred_check_branch
          %414 = sbr.rel (%p412) target = $region52
        $region51: #{tpu_custom_call.1} parent=11 // pred_region
          _
        $region52: #{tpu_custom_call.1} parent=11 // pred_fallthru
          _
        // Predicated region
        $region53: #{tpu_custom_call.1} parent=11 // pred_check
          %p415 = pneg %p281
        $region54: #{tpu_custom_call.1} parent=11 // pred_check_branch
          %417 = sbr.rel (%p415) target = $region56
        $region55: #{tpu_custom_call.1} parent=11 // pred_region
          _
        $region56: #{tpu_custom_call.1} parent=11 // pred_fallthru
          _
        // Predicated region
        $region57: #{tpu_custom_call.1} parent=11 // pred_check
          %p418 = pneg %p302
        $region58: #{tpu_custom_call.1} parent=11 // pred_check_branch
          %420 = sbr.rel (%p418) target = $region60
        $region59: #{tpu_custom_call.1} parent=11 // pred_region
          _
        $region60: #{tpu_custom_call.1} parent=11 // pred_fallthru
          _
        // Predicated region
        $region61: #{tpu_custom_call.1} parent=11 // pred_check
          %p421 = pneg %p323
        $region62: #{tpu_custom_call.1} parent=11 // pred_check_branch
          %423 = sbr.rel (%p421) target = $region64
        $region63: #{tpu_custom_call.1} parent=11 // pred_region
          _
        $region64: #{tpu_custom_call.1} parent=11 // pred_fallthru
          _
        // Predicated region
        $region65: #{tpu_custom_call.1} parent=11 // pred_check
          %p424 = pneg %p344
        $region66: #{tpu_custom_call.1} parent=11 // pred_check_branch
          %426 = sbr.rel (%p424) target = $region68
        $region67: #{tpu_custom_call.1} parent=11 // pred_region
          _
        $region68: #{tpu_custom_call.1} parent=11 // pred_fallthru
          _
      $region12: #{tpu_custom_call.1} parent=5 // pred_fallthru
        _
      %p427 = scmp.lt.s32.totalorder %s24, 2
      // Predicated region
      $region69: #{tpu_custom_call.1} parent=5 // pred_check
        %p428 = pneg %p427
      $region70: #{tpu_custom_call.1} parent=5 // pred_check_branch
        %430 = sbr.rel (%p428) target = $region72
      $region71: #{tpu_custom_call.1} parent=5 // pred_region
        // Predicated region
        $region73: #{tpu_custom_call.1} parent=71 // pred_check
          %p431 = pneg %p44
        $region74: #{tpu_custom_call.1} parent=71 // pred_check_branch
          %433 = sbr.rel (%p431) target = $region76
        $region75: #{tpu_custom_call.1} parent=71 // pred_region
          %p434 = scmp.lt.s32.totalorder %s24, 1
          %s435 = scalar_select %p434, %s24, 1
          %s436 = smul.addr %s435, 8
          %s437 = scalar_lea.vmem %s0, %s436
        $region76: #{tpu_custom_call.1} parent=71 // pred_fallthru
          _
      $region72: #{tpu_custom_call.1} parent=5 // pred_fallthru
        _
      %p438 = scmp.le.s32.totalorder 1, %s24
      %p439 = scmp.lt.s32.totalorder %s24, 3
      %p440 = pnand %p438, %p439
      %p441 = pneg %p440
      // Predicated region
      $region77: #{tpu_custom_call.1} parent=5 // pred_check
        _
      $region78: #{tpu_custom_call.1} parent=5 // pred_check_branch
        %443 = sbr.rel (%p440) target = $region80
      $region79: #{tpu_custom_call.1} parent=5 // pred_region
        %s444 = ssub.s32 %s24, 1
        %p445 = scmp.lt.s32.totalorder %s29, 1
        %s446 = scalar_select %p445, %s29, 1
        %s447 = smul.addr %s446, 8
        %s448 = scalar_lea.vmem %s0, %s447
        %p449 = pneg %p50
        %p450 = pneg %p47
        %p451 = pneg %p71
        %p452 = pneg %p68
        %p453 = pneg %p92
        %p454 = pneg %p89
        %p455 = pneg %p113
        %p456 = pneg %p110
        %p457 = pneg %p134
        %p458 = pneg %p131
        %p459 = pneg %p155
        %p460 = pneg %p152
        %p461 = pneg %p176
        %p462 = pneg %p173
        %p463 = pneg %p197
        %p464 = pneg %p194
        %p465 = pneg %p218
        %p466 = pneg %p215
        %p467 = pneg %p239
        %p468 = pneg %p236
        %p469 = pneg %p260
        %p470 = pneg %p257
        %p471 = pneg %p281
        %p472 = pneg %p278
        %p473 = pneg %p302
        %p474 = pneg %p299
        %p475 = pneg %p323
        %p476 = pneg %p320
        %p477 = pneg %p344
        %p478 = pneg %p341
        %p479 = pneg %p370
        %p480 = pneg %p367
        %s481 = sand.u32 %s357, 1
        %s482 = scalar_lea.sflag [#allocation4], %s481
        %s483 = sand.u32 %s357, 1
        %s484 = smul.addr %s483, 24
        %s485 = scalar_lea.vmem [#allocation3], %s484
        %p486 = scmp.lt.s32.totalorder %s29, 1
        %s487 = scalar_select %p486, %s29, 1
        %s488 = smul.addr %s487, 8
        %s489 = scalar_lea.vmem %s0, %s488
        %491 = vst [vmem:[#allocation2] sm:$0xff] 0.0
        %492 = vst [vmem:[#allocation2 + $0x18] sm:$0xff] 0.0
        %493 = vst [vmem:[#allocation2 + $0x10] sm:$0xff] 0.0
        %494 = vst [vmem:[#allocation2 + $0x28] sm:$0xff] 0.0
        %v495 = vld [vmem:[%s1] sm:$0xf]
        %v496 = vld [vmem:[%s1 + $0x4] sm:$0xf]
        %v497 = vld [vmem:[%s489] sm:$0xff]
        %v498 = vpack.c.bf16 %v497, %v497
        %v499 = vld [vmem:[%s2] sm:$0xff]
        %v500 = vld [vmem:[%s2 + $0x8] sm:$0xff]
        %502 = vset.pattern.permute.xlu0 0
        %503 = vperm.xlu0 %502, %v499
        %v504 = vpop.permute.xlu0 %503
        %507 = vset.pattern.permute.xlu0 0
        %508 = vperm.xlu0 %507, %v500
        %v509 = vpop.permute.xlu0 %508
        %v513 = vunpack.c.l.b16 %v495
        %v514 = vunpack.c.l.b16 %v496
        %v515 = vpack.c.b16 %v514, %v513
        %vm516 = vcmask 64512
        %v518 = vsel %vm516, %v515, 0
        %vm520 = vcmask 1043456
        %v522 = vsel %vm520, %v498, 0
        %524 = vmatprep.subr.bf16.mxu0 0
        %525 = vmatpush1.bf16.msra.mxu0 %v522
        %526 = vmatprep.subr.bf16.mxu0 0
        %527 = vmatpush1.bf16.msra.mxu0 0
        %528 = vmatprep.subr.bf16.mxu0 0
        %529 = vmatpush1.bf16.msra.mxu0 0
        %530 = vmatprep.subr.bf16.mxu0 0
        %531 = vmatpush1.bf16.msra.mxu0 0
        %532 = vmatprep.subr.bf16.mxu0 0
        %533 = vmatpush1.bf16.msra.mxu0 0
        %534 = vmatprep.subr.bf16.mxu0 0
        %535 = vmatpush1.bf16.msra.mxu0 0
        %536 = vmatprep.subr.bf16.mxu0 0
        %537 = vmatpush1.bf16.msra.mxu0 0
        %538 = vmatprep.subr.bf16.mxu0 0
        %539 = vmatpush1.bf16.msra.mxu0 0
        %540 = vmatprep.subr.bf16.mxu0 0
        %541 = vmatpush1.bf16.msra.mxu0 0
        %542 = vmatprep.subr.bf16.mxu0 0
        %543 = vmatpush1.bf16.msra.mxu0 0
        %544 = vmatprep.subr.bf16.mxu0 0
        %545 = vmatpush1.bf16.msra.mxu0 0
        %546 = vmatprep.subr.bf16.mxu0 0
        %547 = vmatpush1.bf16.msra.mxu0 0
        %548 = vmatprep.subr.bf16.mxu0 0
        %549 = vmatpush1.bf16.msra.mxu0 0
        %550 = vmatprep.subr.bf16.mxu0 0
        %551 = vmatpush1.bf16.msra.mxu0 0
        %552 = vmatprep.subr.bf16.mxu0 0
        %553 = vmatpush1.bf16.msra.mxu0 0
        %554 = vmatprep.subr.bf16.mxu0 0
        %555 = vmatpush1.bf16.msra.mxu0 0
        %556 = vmatprep.mubr.bf16.mxu0 0
        %557 = vmatmul.mubr.bf16.gmra.mrb[0].mxu0 %v518
        %v558 = vpop.f32.mrb[0].mxu0
        %v559 = vadd.f32 %v504, %v558
        %v560 = vpop.f32.mrb[0].mxu0
        %v561 = vpop.f32.mrb[0].mxu0
        %v562 = vadd.f32 %v509, %v561
        %v563 = vpop.f32.mrb[0].mxu0
        %564 = vdwg.mxu0
        %565 = vst [vmem:[#allocation2 + $0x8] sm:$0xff] %v559
        %566 = vst [vmem:[#allocation2 + $0x20] sm:$0xff] %v562
        %v567 = vld [vmem:[#allocation2] sm:$0xff]
        %v568 = vld [vmem:[#allocation2 + $0x8] sm:$0xff]
        %v569 = vld [vmem:[#allocation2 + $0x10] sm:$0xff]
        %v570 = vld [vmem:[#allocation2 + $0x18] sm:$0xff]
        %v571 = vld [vmem:[#allocation2 + $0x20] sm:$0xff]
        %v572 = vld [vmem:[#allocation2 + $0x28] sm:$0xff]
        %575 = vrot.lane.b32.xlu0 %v568, 124
        %v576 = vpop.permute.xlu0 %575
        %577 = vrot.lane.b32.xlu0 %v571, 124
        %v578 = vpop.permute.xlu0 %577
        %583 = vrot.lane.b32.xlu0 %v568, 120
        %v584 = vpop.permute.xlu0 %583
        %585 = vrot.lane.b32.xlu0 %v569, 120
        %v586 = vpop.permute.xlu0 %585
        %587 = vrot.lane.b32.xlu0 %v571, 120
        %v588 = vpop.permute.xlu0 %587
        %589 = vrot.lane.b32.xlu0 %v572, 120
        %v590 = vpop.permute.xlu0 %589
        %vm591 = vcmask 982016
        %v592 = vsel %vm591, %v584, %v586
        %v593 = vsel %vm591, %v588, %v590
        %600 = vrot.lane.b32.xlu0 %v567, 125
        %v601 = vpop.permute.xlu0 %600
        %602 = vrot.lane.b32.xlu0 %v568, 125
        %v603 = vpop.permute.xlu0 %602
        %604 = vrot.lane.b32.xlu0 %v570, 125
        %v605 = vpop.permute.xlu0 %604
        %606 = vrot.lane.b32.xlu0 %v571, 125
        %v607 = vpop.permute.xlu0 %606
        %vm608 = vcmask 1022976
        %v609 = vsel %vm608, %v601, %v603
        %v610 = vsel %vm608, %v605, %v607
        %615 = vrot.lane.b32.xlu0 %v568, 123
        %v616 = vpop.permute.xlu0 %615
        %617 = vrot.lane.b32.xlu0 %v569, 123
        %v618 = vpop.permute.xlu0 %617
        %619 = vrot.lane.b32.xlu0 %v571, 123
        %v620 = vpop.permute.xlu0 %619
        %621 = vrot.lane.b32.xlu0 %v572, 123
        %v622 = vpop.permute.xlu0 %621
        %vm623 = vcmask 1006592
        %v624 = vsel %vm623, %v616, %v618
        %v625 = vsel %vm623, %v620, %v622
        %v630 = vld [vmem:[%s3] sm:$0xf]
        %v631 = vld [vmem:[%s3 + $0x4] sm:$0xf]
        %v632 = vpack.c.bf16 %v570, %v567
        %v633 = vpack.c.bf16 %v571, %v568
        %v634 = vpack.c.bf16 %v578, %v576
        %v635 = vpack.c.bf16 %v588, %v584
        %v636 = vpack.c.bf16 %v593, %v592
        %v637 = vpack.c.bf16 %v610, %v609
        %v638 = vpack.c.bf16 %v607, %v603
        %v639 = vpack.c.bf16 %v620, %v616
        %v640 = vpack.c.bf16 %v625, %v624
        %v641 = vld [vmem:[%s4] sm:$0xff]
        %v642 = vld [vmem:[%s4 + $0x8] sm:$0xff]
        %644 = vset.pattern.permute.xlu0 0
        %645 = vperm.xlu0 %644, %v641
        %v646 = vpop.permute.xlu0 %645
        %649 = vset.pattern.permute.xlu0 0
        %650 = vperm.xlu0 %649, %v642
        %v651 = vpop.permute.xlu0 %650
        %v655 = vunpack.c.l.b16 %v630
        %v656 = vunpack.c.l.b16 %v631
        %v657 = vpack.c.b16 %v656, %v655
        %667 = vrot.lane.b32.xlu0 %v632, 4
        %v668 = vpop.permute.xlu0 %667
        %669 = vrot.lane.b32.xlu0 %v633, 4
        %v670 = vpop.permute.xlu0 %669
        %671 = vrot.lane.b32.xlu0 %v634, 4
        %v672 = vpop.permute.xlu0 %671
        %673 = vrot.lane.b32.xlu0 %v635, 4
        %v674 = vpop.permute.xlu0 %673
        %675 = vrot.lane.b32.xlu0 %v636, 4
        %v676 = vpop.permute.xlu0 %675
        %677 = vrot.lane.b32.xlu0 %v637, 4
        %v678 = vpop.permute.xlu0 %677
        %679 = vrot.lane.b32.xlu0 %v638, 4
        %v680 = vpop.permute.xlu0 %679
        %681 = vrot.lane.b32.xlu0 %v639, 4
        %v682 = vpop.permute.xlu0 %681
        %683 = vrot.lane.b32.xlu0 %v640, 4
        %v684 = vpop.permute.xlu0 %683
        %vm685 = vcmask 31744
        %v686 = vsel %vm685, %v668, %v670
        %v687 = vsel %vm685, %v674, %v676
        %v688 = vsel %vm685, %v678, %v680
        %v689 = vsel %vm685, %v682, %v684
        %vm695 = vcmask 654336
        %v697 = vsel %vm695, %v657, 0
        %699 = vmatprep.subr.bf16.mxu0 0
        %700 = vmatpush1.bf16.msra.mxu0 %v686
        %701 = vmatprep.subr.bf16.mxu0 0
        %702 = vmatpush1.bf16.msra.mxu0 %v672
        %703 = vmatprep.subr.bf16.mxu0 0
        %704 = vmatpush1.bf16.msra.mxu0 %v687
        %705 = vmatprep.subr.bf16.mxu0 0
        %706 = vmatpush1.bf16.msra.mxu0 %v688
        %707 = vmatprep.subr.bf16.mxu0 0
        %708 = vmatpush1.bf16.msra.mxu0 %v689
        %709 = vmatprep.subr.bf16.mxu0 0
        %710 = vmatpush1.bf16.msra.mxu0 0
        %711 = vmatprep.subr.bf16.mxu0 0
        %712 = vmatpush1.bf16.msra.mxu0 0
        %713 = vmatprep.subr.bf16.mxu0 0
        %714 = vmatpush1.bf16.msra.mxu0 0
        %715 = vmatprep.subr.bf16.mxu0 0
        %716 = vmatpush1.bf16.msra.mxu0 0
        %717 = vmatprep.subr.bf16.mxu0 0
        %718 = vmatpush1.bf16.msra.mxu0 0
        %719 = vmatprep.subr.bf16.mxu0 0
        %720 = vmatpush1.bf16.msra.mxu0 0
        %721 = vmatprep.subr.bf16.mxu0 0
        %722 = vmatpush1.bf16.msra.mxu0 0
        %723 = vmatprep.subr.bf16.mxu0 0
        %724 = vmatpush1.bf16.msra.mxu0 0
        %725 = vmatprep.subr.bf16.mxu0 0
        %726 = vmatpush1.bf16.msra.mxu0 0
        %727 = vmatprep.subr.bf16.mxu0 0
        %728 = vmatpush1.bf16.msra.mxu0 0
        %729 = vmatprep.subr.bf16.mxu0 0
        %730 = vmatpush1.bf16.msra.mxu0 0
        %731 = vmatprep.mubr.bf16.mxu0 0
        %732 = vmatmul.mubr.bf16.gmra.mrb[0].mxu0 %v697
        %v733 = vpop.f32.mrb[0].mxu0
        %v734 = vadd.f32 %v646, %v733
        %v735 = vpop.f32.mrb[0].mxu0
        %v736 = vpop.f32.mrb[0].mxu0
        %v737 = vadd.f32 %v651, %v736
        %v738 = vpop.f32.mrb[0].mxu0
        %739 = vdwg.mxu0
        %v740 = vmax.f32 %v734, 0.0
        %v741 = vmax.f32 %v737, 0.0
        %v742 = vadd.f32 %v740, %v568
        %v743 = vadd.f32 %v741, %v571
        %744 = vst [vmem:[#allocation2 + $0x8] sm:$0xff] %v742
        %745 = vst [vmem:[#allocation2 + $0x20] sm:$0xff] %v743
        %v746 = vld [vmem:[#allocation2] sm:$0xff]
        %v747 = vld [vmem:[#allocation2 + $0x8] sm:$0xff]
        %v748 = vld [vmem:[#allocation2 + $0x10] sm:$0xff]
        %v749 = vld [vmem:[#allocation2 + $0x18] sm:$0xff]
        %v750 = vld [vmem:[#allocation2 + $0x20] sm:$0xff]
        %v751 = vld [vmem:[#allocation2 + $0x28] sm:$0xff]
        %754 = vrot.lane.b32.xlu0 %v747, 126
        %v755 = vpop.permute.xlu0 %754
        %756 = vrot.lane.b32.xlu0 %v750, 126
        %v757 = vpop.permute.xlu0 %756
        %762 = vrot.lane.b32.xlu0 %v747, 124
        %v763 = vpop.permute.xlu0 %762
        %764 = vrot.lane.b32.xlu0 %v748, 124
        %v765 = vpop.permute.xlu0 %764
        %766 = vrot.lane.b32.xlu0 %v750, 124
        %v767 = vpop.permute.xlu0 %766
        %768 = vrot.lane.b32.xlu0 %v751, 124
        %v769 = vpop.permute.xlu0 %768
        %vm770 = vcmask 1014784
        %v771 = vsel %vm770, %v763, %v765
        %v772 = vsel %vm770, %v767, %v769
        %s777 = scalar_lea.vmem %s3, 8
        %v778 = vld [vmem:[%s777] sm:$0xf]
        %v779 = vld [vmem:[%s777 + $0x4] sm:$0xf]
        %v780 = vpack.c.bf16 %v749, %v746
        %v781 = vpack.c.bf16 %v750, %v747
        %v782 = vpack.c.bf16 %v757, %v755
        %v783 = vpack.c.bf16 %v767, %v763
        %v784 = vpack.c.bf16 %v772, %v771
        %s785 = scalar_lea.vmem %s4, 16
        %v786 = vld [vmem:[%s785] sm:$0xff]
        %v787 = vld [vmem:[%s785 + $0x8] sm:$0xff]
        %789 = vset.pattern.permute.xlu0 0
        %790 = vperm.xlu0 %789, %v786
        %v791 = vpop.permute.xlu0 %790
        %794 = vset.pattern.permute.xlu0 0
        %795 = vperm.xlu0 %794, %v787
        %v796 = vpop.permute.xlu0 %795
        %v800 = vunpack.c.l.b16 %v778
        %v801 = vunpack.c.l.b16 %v779
        %v802 = vpack.c.b16 %v801, %v800
        %808 = vrot.lane.b32.xlu0 %v780, 2
        %v809 = vpop.permute.xlu0 %808
        %810 = vrot.lane.b32.xlu0 %v781, 2
        %v811 = vpop.permute.xlu0 %810
        %812 = vrot.lane.b32.xlu0 %v782, 2
        %v813 = vpop.permute.xlu0 %812
        %814 = vrot.lane.b32.xlu0 %v783, 2
        %v815 = vpop.permute.xlu0 %814
        %816 = vrot.lane.b32.xlu0 %v784, 2
        %v817 = vpop.permute.xlu0 %816
        %vm818 = vcmask 15360
        %v819 = vsel %vm818, %v809, %v811
        %v820 = vsel %vm818, %v815, %v817
        %v825 = vsel %vm695, %v802, 0
        %827 = vmatprep.subr.bf16.mxu0 0
        %828 = vmatpush1.bf16.msra.mxu0 %v819
        %829 = vmatprep.subr.bf16.mxu0 0
        %830 = vmatpush1.bf16.msra.mxu0 %v813
        %831 = vmatprep.subr.bf16.mxu0 0
        %832 = vmatpush1.bf16.msra.mxu0 %v820
        %833 = vmatprep.subr.bf16.mxu0 0
        %834 = vmatpush1.bf16.msra.mxu0 %v819
        %835 = vmatprep.subr.bf16.mxu0 0
        %836 = vmatpush1.bf16.msra.mxu0 %v820
        %837 = vmatprep.subr.bf16.mxu0 0
        %838 = vmatpush1.bf16.msra.mxu0 0
        %839 = vmatprep.subr.bf16.mxu0 0
        %840 = vmatpush1.bf16.msra.mxu0 0
        %841 = vmatprep.subr.bf16.mxu0 0
        %842 = vmatpush1.bf16.msra.mxu0 0
        %843 = vmatprep.subr.bf16.mxu0 0
        %844 = vmatpush1.bf16.msra.mxu0 0
        %845 = vmatprep.subr.bf16.mxu0 0
        %846 = vmatpush1.bf16.msra.mxu0 0
        %847 = vmatprep.subr.bf16.mxu0 0
        %848 = vmatpush1.bf16.msra.mxu0 0
        %849 = vmatprep.subr.bf16.mxu0 0
        %850 = vmatpush1.bf16.msra.mxu0 0
        %851 = vmatprep.subr.bf16.mxu0 0
        %852 = vmatpush1.bf16.msra.mxu0 0
        %853 = vmatprep.subr.bf16.mxu0 0
        %854 = vmatpush1.bf16.msra.mxu0 0
        %855 = vmatprep.subr.bf16.mxu0 0
        %856 = vmatpush1.bf16.msra.mxu0 0
        %857 = vmatprep.subr.bf16.mxu0 0
        %858 = vmatpush1.bf16.msra.mxu0 0
        %859 = vmatprep.mubr.bf16.mxu0 0
        %860 = vmatmul.mubr.bf16.gmra.mrb[0].mxu0 %v825
        %v861 = vpop.f32.mrb[0].mxu0
        %v862 = vadd.f32 %v791, %v861
        %v863 = vpop.f32.mrb[0].mxu0
        %v864 = vpop.f32.mrb[0].mxu0
        %v865 = vadd.f32 %v796, %v864
        %v866 = vpop.f32.mrb[0].mxu0
        %867 = vdwg.mxu0
        %v868 = vmax.f32 %v862, 0.0
        %v869 = vmax.f32 %v865, 0.0
        %v870 = vadd.f32 %v868, %v747
        %v871 = vadd.f32 %v869, %v750
        %872 = vst [vmem:[#allocation2 + $0x8] sm:$0xff] %v870
        %873 = vst [vmem:[#allocation2 + $0x20] sm:$0xff] %v871
        %v874 = vld [vmem:[#allocation2] sm:$0xff]
        %v875 = vld [vmem:[#allocation2 + $0x8] sm:$0xff]
        %v876 = vld [vmem:[#allocation2 + $0x10] sm:$0xff]
        %v877 = vld [vmem:[#allocation2 + $0x18] sm:$0xff]
        %v878 = vld [vmem:[#allocation2 + $0x20] sm:$0xff]
        %v879 = vld [vmem:[#allocation2 + $0x28] sm:$0xff]
        %882 = vrot.lane.b32.xlu0 %v875, 127
        %v883 = vpop.permute.xlu0 %882
        %884 = vrot.lane.b32.xlu0 %v878, 127
        %v885 = vpop.permute.xlu0 %884
        %890 = vrot.lane.b32.xlu0 %v875, 126
        %v891 = vpop.permute.xlu0 %890
        %892 = vrot.lane.b32.xlu0 %v876, 126
        %v893 = vpop.permute.xlu0 %892
        %894 = vrot.lane.b32.xlu0 %v878, 126
        %v895 = vpop.permute.xlu0 %894
        %896 = vrot.lane.b32.xlu0 %v879, 126
        %v897 = vpop.permute.xlu0 %896
        %vm898 = vcmask 1031168
        %v899 = vsel %vm898, %v891, %v893
        %v900 = vsel %vm898, %v895, %v897
        %907 = vrot.lane.b32.xlu0 %v874, 3
        %v908 = vpop.permute.xlu0 %907
        %909 = vrot.lane.b32.xlu0 %v875, 3
        %v910 = vpop.permute.xlu0 %909
        %911 = vrot.lane.b32.xlu0 %v877, 3
        %v912 = vpop.permute.xlu0 %911
        %913 = vrot.lane.b32.xlu0 %v878, 3
        %v914 = vpop.permute.xlu0 %913
        %vm915 = vcmask 23552
        %v916 = vsel %vm915, %v908, %v910
        %v917 = vsel %vm915, %v912, %v914
        %922 = vrot.lane.b32.xlu0 %v875, 123
        %v923 = vpop.permute.xlu0 %922
        %924 = vrot.lane.b32.xlu0 %v876, 123
        %v925 = vpop.permute.xlu0 %924
        %926 = vrot.lane.b32.xlu0 %v878, 123
        %v927 = vpop.permute.xlu0 %926
        %928 = vrot.lane.b32.xlu0 %v879, 123
        %v929 = vpop.permute.xlu0 %928
        %v930 = vsel %vm623, %v923, %v925
        %v931 = vsel %vm623, %v927, %v929
        %s936 = scalar_lea.vmem %s3, 16
        %v937 = vld [vmem:[%s936] sm:$0xf]
        %v938 = vld [vmem:[%s936 + $0x4] sm:$0xf]
        %v939 = vpack.c.bf16 %v877, %v874
        %v940 = vpack.c.bf16 %v878, %v875
        %v941 = vpack.c.bf16 %v885, %v883
        %v942 = vpack.c.bf16 %v895, %v891
        %v943 = vpack.c.bf16 %v900, %v899
        %v944 = vpack.c.bf16 %v912, %v908
        %v945 = vpack.c.bf16 %v917, %v916
        %v946 = vpack.c.bf16 %v927, %v923
        %v947 = vpack.c.bf16 %v931, %v930
        %s948 = scalar_lea.vmem %s4, 32
        %v949 = vld [vmem:[%s948] sm:$0xff]
        %v950 = vld [vmem:[%s948 + $0x8] sm:$0xff]
        %952 = vset.pattern.permute.xlu0 0
        %953 = vperm.xlu0 %952, %v949
        %v954 = vpop.permute.xlu0 %953
        %957 = vset.pattern.permute.xlu0 0
        %958 = vperm.xlu0 %957, %v950
        %v959 = vpop.permute.xlu0 %958
        %v963 = vunpack.c.l.b16 %v937
        %v964 = vunpack.c.l.b16 %v938
        %v965 = vpack.c.b16 %v964, %v963
        %975 = vrot.lane.b32.xlu0 %v939, 1
        %v976 = vpop.permute.xlu0 %975
        %977 = vrot.lane.b32.xlu0 %v940, 1
        %v978 = vpop.permute.xlu0 %977
        %979 = vrot.lane.b32.xlu0 %v941, 1
        %v980 = vpop.permute.xlu0 %979
        %981 = vrot.lane.b32.xlu0 %v942, 1
        %v982 = vpop.permute.xlu0 %981
        %983 = vrot.lane.b32.xlu0 %v943, 1
        %v984 = vpop.permute.xlu0 %983
        %985 = vrot.lane.b32.xlu0 %v944, 1
        %v986 = vpop.permute.xlu0 %985
        %987 = vrot.lane.b32.xlu0 %v945, 1
        %v988 = vpop.permute.xlu0 %987
        %989 = vrot.lane.b32.xlu0 %v946, 1
        %v990 = vpop.permute.xlu0 %989
        %991 = vrot.lane.b32.xlu0 %v947, 1
        %v992 = vpop.permute.xlu0 %991
        %vm993 = vcmask 7168
        %v994 = vsel %vm993, %v976, %v978
        %v995 = vsel %vm993, %v982, %v984
        %v996 = vsel %vm993, %v986, %v988
        %v997 = vsel %vm993, %v990, %v992
        %v1004 = vsel %vm695, %v965, 0
        %1006 = vmatprep.subr.bf16.mxu0 0
        %1007 = vmatpush1.bf16.msra.mxu0 %v994
        %1008 = vmatprep.subr.bf16.mxu0 0
        %1009 = vmatpush1.bf16.msra.mxu0 %v980
        %1010 = vmatprep.subr.bf16.mxu0 0
        %1011 = vmatpush1.bf16.msra.mxu0 %v995
        %1012 = vmatprep.subr.bf16.mxu0 0
        %1013 = vmatpush1.bf16.msra.mxu0 %v996
        %1014 = vmatprep.subr.bf16.mxu0 0
        %1015 = vmatpush1.bf16.msra.mxu0 %v997
        %1016 = vmatprep.subr.bf16.mxu0 0
        %1017 = vmatpush1.bf16.msra.mxu0 0
        %1018 = vmatprep.subr.bf16.mxu0 0
        %1019 = vmatpush1.bf16.msra.mxu0 0
        %1020 = vmatprep.subr.bf16.mxu0 0
        %1021 = vmatpush1.bf16.msra.mxu0 0
        %1022 = vmatprep.subr.bf16.mxu0 0
        %1023 = vmatpush1.bf16.msra.mxu0 0
        %1024 = vmatprep.subr.bf16.mxu0 0
        %1025 = vmatpush1.bf16.msra.mxu0 0
        %1026 = vmatprep.subr.bf16.mxu0 0
        %1027 = vmatpush1.bf16.msra.mxu0 0
        %1028 = vmatprep.subr.bf16.mxu0 0
        %1029 = vmatpush1.bf16.msra.mxu0 0
        %1030 = vmatprep.subr.bf16.mxu0 0
        %1031 = vmatpush1.bf16.msra.mxu0 0
        %1032 = vmatprep.subr.bf16.mxu0 0
        %1033 = vmatpush1.bf16.msra.mxu0 0
        %1034 = vmatprep.subr.bf16.mxu0 0
        %1035 = vmatpush1.bf16.msra.mxu0 0
        %1036 = vmatprep.subr.bf16.mxu0 0
        %1037 = vmatpush1.bf16.msra.mxu0 0
        %1038 = vmatprep.mubr.bf16.mxu0 0
        %1039 = vmatmul.mubr.bf16.gmra.mrb[0].mxu0 %v1004
        %v1040 = vpop.f32.mrb[0].mxu0
        %v1041 = vadd.f32 %v954, %v1040
        %v1042 = vpop.f32.mrb[0].mxu0
        %v1043 = vpop.f32.mrb[0].mxu0
        %v1044 = vadd.f32 %v959, %v1043
        %v1045 = vpop.f32.mrb[0].mxu0
        %1046 = vdwg.mxu0
        %v1047 = vmax.f32 %v1041, 0.0
        %v1048 = vmax.f32 %v1044, 0.0
        %v1049 = vadd.f32 %v1047, %v875
        %v1050 = vadd.f32 %v1048, %v878
        %1051 = vst [vmem:[#allocation2 + $0x8] sm:$0xff] %v1049
        %1052 = vst [vmem:[#allocation2 + $0x20] sm:$0xff] %v1050
        %v1053 = vld [vmem:[%s5] sm:$0xf]
        %v1054 = vld [vmem:[#allocation2 + $0x8] sm:$0xff]
        %v1055 = vld [vmem:[#allocation2 + $0x20] sm:$0xff]
        %v1056 = vpack.c.bf16 %v1055, %v1054
        %v1057 = vld [vmem:[%s6] sm:$0xff]
        %1059 = vset.pattern.permute.xlu0 0
        %1060 = vperm.xlu0 %1059, %v1057
        %v1061 = vpop.permute.xlu0 %1060
        %vm1063 = vcmask 130048
        %v1065 = vsel %vm1063, %v1053, 0
        %1067 = vmatprep.subr.bf16.mxu0 0
        %1068 = vmatpush1.bf16.msra.mxu0 %v1056
        %1069 = vmatprep.subr.bf16.mxu0 0
        %1070 = vmatpush1.bf16.msra.mxu0 0
        %1071 = vmatprep.subr.bf16.mxu0 0
        %1072 = vmatpush1.bf16.msra.mxu0 0
        %1073 = vmatprep.subr.bf16.mxu0 0
        %1074 = vmatpush1.bf16.msra.mxu0 0
        %1075 = vmatprep.subr.bf16.mxu0 0
        %1076 = vmatpush1.bf16.msra.mxu0 0
        %1077 = vmatprep.subr.bf16.mxu0 0
        %1078 = vmatpush1.bf16.msra.mxu0 0
        %1079 = vmatprep.subr.bf16.mxu0 0
        %1080 = vmatpush1.bf16.msra.mxu0 0
        %1081 = vmatprep.subr.bf16.mxu0 0
        %1082 = vmatpush1.bf16.msra.mxu0 0
        %1083 = vmatprep.subr.bf16.mxu0 0
        %1084 = vmatpush1.bf16.msra.mxu0 0
        %1085 = vmatprep.subr.bf16.mxu0 0
        %1086 = vmatpush1.bf16.msra.mxu0 0
        %1087 = vmatprep.subr.bf16.mxu0 0
        %1088 = vmatpush1.bf16.msra.mxu0 0
        %1089 = vmatprep.subr.bf16.mxu0 0
        %1090 = vmatpush1.bf16.msra.mxu0 0
        %1091 = vmatprep.subr.bf16.mxu0 0
        %1092 = vmatpush1.bf16.msra.mxu0 0
        %1093 = vmatprep.subr.bf16.mxu0 0
        %1094 = vmatpush1.bf16.msra.mxu0 0
        %1095 = vmatprep.subr.bf16.mxu0 0
        %1096 = vmatpush1.bf16.msra.mxu0 0
        %1097 = vmatprep.subr.bf16.mxu0 0
        %1098 = vmatpush1.bf16.msra.mxu0 0
        %1099 = vmatprep.mubr.bf16.mxu0 0
        %1100 = vmatmul.mubr.bf16.gmra.mrb[0].mxu0 %v1065
        %v1101 = vpop.f32.mrb[0].mxu0
        %v1102 = vadd.f32 %v1061, %v1101
        %v1103 = vpop.f32.mrb[0].mxu0
        %v1104 = vpop.f32.mrb[0].mxu0
        %v1105 = vpop.f32.mrb[0].mxu0
        %1106 = vdwg.mxu0
        %1107 = vst [vmem:[%s485] sm:$0xff] %v1102
        %v1108 = vrot.slane %v1102, 4
        %v1109 = vmax.f32 %v1102, %v1108
        %v1110 = vrot.slane %v1109, 2
        %v1111 = vmax.f32 %v1109, %v1110
        %v1112 = vrot.slane %v1111, 1
        %v1113 = vmax.f32 %v1111, %v1112
        %v1114 = vsub.f32 %v1102, %v1113
        %v1115 = vmul.f32 %v1114, 1.442695
        %v1116 = vpow.pop %v1115
        %v1117 = vrot.slane %v1116, 4
        %v1118 = vadd.f32 %v1116, %v1117
        %v1119 = vrot.slane %v1118, 2
        %v1120 = vadd.f32 %v1118, %v1119
        %v1121 = vrot.slane %v1120, 1
        %v1122 = vadd.f32 %v1120, %v1121
        %v1123 = vrcp.pop %v1122
        %v1124 = vmul.f32 %v1116, %v1123
        %v1125 = vld [vmem:[%s7] sm:$0xf]
        %v1126 = vld [vmem:[%s7 + $0x4] sm:$0xf]
        %v1127 = vpack.c.bf16 %v1124, %v1124
        %v1128 = vld [vmem:[%s8] sm:$0xff]
        %v1129 = vld [vmem:[%s8 + $0x8] sm:$0xff]
        %1131 = vset.pattern.permute.xlu0 0
        %1132 = vperm.xlu0 %1131, %v1128
        %v1133 = vpop.permute.xlu0 %1132
        %1136 = vset.pattern.permute.xlu0 0
        %1137 = vperm.xlu0 %1136, %v1129
        %v1138 = vpop.permute.xlu0 %1137
        %v1142 = vunpack.c.l.b16 %v1125
        %v1143 = vunpack.c.l.b16 %v1126
        %v1144 = vpack.c.b16 %v1143, %v1142
        %v1146 = vsel %vm516, %v1144, 0
        %v1149 = vsel %vm520, %v1127, 0
        %1151 = vmatprep.subr.bf16.mxu0 0
        %1152 = vmatpush1.bf16.msra.mxu0 %v1149
        %1153 = vmatprep.subr.bf16.mxu0 0
        %1154 = vmatpush1.bf16.msra.mxu0 0
        %1155 = vmatprep.subr.bf16.mxu0 0
        %1156 = vmatpush1.bf16.msra.mxu0 0
        %1157 = vmatprep.subr.bf16.mxu0 0
        %1158 = vmatpush1.bf16.msra.mxu0 0
        %1159 = vmatprep.subr.bf16.mxu0 0
        %1160 = vmatpush1.bf16.msra.mxu0 0
        %1161 = vmatprep.subr.bf16.mxu0 0
        %1162 = vmatpush1.bf16.msra.mxu0 0
        %1163 = vmatprep.subr.bf16.mxu0 0
        %1164 = vmatpush1.bf16.msra.mxu0 0
        %1165 = vmatprep.subr.bf16.mxu0 0
        %1166 = vmatpush1.bf16.msra.mxu0 0
        %1167 = vmatprep.subr.bf16.mxu0 0
        %1168 = vmatpush1.bf16.msra.mxu0 0
        %1169 = vmatprep.subr.bf16.mxu0 0
        %1170 = vmatpush1.bf16.msra.mxu0 0
        %1171 = vmatprep.subr.bf16.mxu0 0
        %1172 = vmatpush1.bf16.msra.mxu0 0
        %1173 = vmatprep.subr.bf16.mxu0 0
        %1174 = vmatpush1.bf16.msra.mxu0 0
        %1175 = vmatprep.subr.bf16.mxu0 0
        %1176 = vmatpush1.bf16.msra.mxu0 0
        %1177 = vmatprep.subr.bf16.mxu0 0
        %1178 = vmatpush1.bf16.msra.mxu0 0
        %1179 = vmatprep.subr.bf16.mxu0 0
        %1180 = vmatpush1.bf16.msra.mxu0 0
        %1181 = vmatprep.subr.bf16.mxu0 0
        %1182 = vmatpush1.bf16.msra.mxu0 0
        %1183 = vmatprep.mubr.bf16.mxu0 0
        %1184 = vmatmul.mubr.bf16.gmra.mrb[0].mxu0 %v1146
        %v1185 = vpop.f32.mrb[0].mxu0
        %v1186 = vadd.f32 %v1133, %v1185
        %v1187 = vpop.f32.mrb[0].mxu0
        %v1188 = vpop.f32.mrb[0].mxu0
        %v1189 = vadd.f32 %v1138, %v1188
        %v1190 = vpop.f32.mrb[0].mxu0
        %1191 = vdwg.mxu0
        %1192 = vst [vmem:[#allocation2 + $0x8] sm:$0xff] %v1186
        %1193 = vst [vmem:[#allocation2 + $0x20] sm:$0xff] %v1189
        %v1194 = vld [vmem:[#allocation2] sm:$0xff]
        %v1195 = vld [vmem:[#allocation2 + $0x8] sm:$0xff]
        %v1196 = vld [vmem:[#allocation2 + $0x10] sm:$0xff]
        %v1197 = vld [vmem:[#allocation2 + $0x18] sm:$0xff]
        %v1198 = vld [vmem:[#allocation2 + $0x20] sm:$0xff]
        %v1199 = vld [vmem:[#allocation2 + $0x28] sm:$0xff]
        %1202 = vrot.lane.b32.xlu0 %v1195, 127
        %v1203 = vpop.permute.xlu0 %1202
        %1204 = vrot.lane.b32.xlu0 %v1198, 127
        %v1205 = vpop.permute.xlu0 %1204
        %1210 = vrot.lane.b32.xlu0 %v1195, 126
        %v1211 = vpop.permute.xlu0 %1210
        %1212 = vrot.lane.b32.xlu0 %v1196, 126
        %v1213 = vpop.permute.xlu0 %1212
        %1214 = vrot.lane.b32.xlu0 %v1198, 126
        %v1215 = vpop.permute.xlu0 %1214
        %1216 = vrot.lane.b32.xlu0 %v1199, 126
        %v1217 = vpop.permute.xlu0 %1216
        %v1218 = vsel %vm898, %v1211, %v1213
        %v1219 = vsel %vm898, %v1215, %v1217
        %v1224 = vld [vmem:[%s9] sm:$0xf]
        %v1225 = vld [vmem:[%s9 + $0x4] sm:$0xf]
        %v1226 = vpack.c.bf16 %v1197, %v1194
        %v1227 = vpack.c.bf16 %v1198, %v1195
        %v1228 = vpack.c.bf16 %v1205, %v1203
        %v1229 = vpack.c.bf16 %v1215, %v1211
        %v1230 = vpack.c.bf16 %v1219, %v1218
        %v1231 = vld [vmem:[%s10] sm:$0xff]
        %v1232 = vld [vmem:[%s10 + $0x8] sm:$0xff]
        %1234 = vset.pattern.permute.xlu0 0
        %1235 = vperm.xlu0 %1234, %v1231
        %v1236 = vpop.permute.xlu0 %1235
        %1239 = vset.pattern.permute.xlu0 0
        %1240 = vperm.xlu0 %1239, %v1232
        %v1241 = vpop.permute.xlu0 %1240
        %v1245 = vunpack.c.l.b16 %v1224
        %v1246 = vunpack.c.l.b16 %v1225
        %v1247 = vpack.c.b16 %v1246, %v1245
        %1253 = vrot.lane.b32.xlu0 %v1226, 1
        %v1254 = vpop.permute.xlu0 %1253
        %1255 = vrot.lane.b32.xlu0 %v1227, 1
        %v1256 = vpop.permute.xlu0 %1255
        %1257 = vrot.lane.b32.xlu0 %v1228, 1
        %v1258 = vpop.permute.xlu0 %1257
        %1259 = vrot.lane.b32.xlu0 %v1229, 1
        %v1260 = vpop.permute.xlu0 %1259
        %1261 = vrot.lane.b32.xlu0 %v1230, 1
        %v1262 = vpop.permute.xlu0 %1261
        %v1263 = vsel %vm993, %v1254, %v1256
        %v1264 = vsel %vm993, %v1260, %v1262
        %vm1268 = vcmask 392192
        %v1270 = vsel %vm1268, %v1247, 0
        %1272 = vmatprep.subr.bf16.mxu0 0
        %1273 = vmatpush1.bf16.msra.mxu0 %v1263
        %1274 = vmatprep.subr.bf16.mxu0 0
        %1275 = vmatpush1.bf16.msra.mxu0 %v1258
        %1276 = vmatprep.subr.bf16.mxu0 0
        %1277 = vmatpush1.bf16.msra.mxu0 %v1264
        %1278 = vmatprep.subr.bf16.mxu0 0
        %1279 = vmatpush1.bf16.msra.mxu0 0
        %1280 = vmatprep.subr.bf16.mxu0 0
        %1281 = vmatpush1.bf16.msra.mxu0 0
        %1282 = vmatprep.subr.bf16.mxu0 0
        %1283 = vmatpush1.bf16.msra.mxu0 0
        %1284 = vmatprep.subr.bf16.mxu0 0
        %1285 = vmatpush1.bf16.msra.mxu0 0
        %1286 = vmatprep.subr.bf16.mxu0 0
        %1287 = vmatpush1.bf16.msra.mxu0 0
        %1288 = vmatprep.subr.bf16.mxu0 0
        %1289 = vmatpush1.bf16.msra.mxu0 0
        %1290 = vmatprep.subr.bf16.mxu0 0
        %1291 = vmatpush1.bf16.msra.mxu0 0
        %1292 = vmatprep.subr.bf16.mxu0 0
        %1293 = vmatpush1.bf16.msra.mxu0 0
        %1294 = vmatprep.subr.bf16.mxu0 0
        %1295 = vmatpush1.bf16.msra.mxu0 0
        %1296 = vmatprep.subr.bf16.mxu0 0
        %1297 = vmatpush1.bf16.msra.mxu0 0
        %1298 = vmatprep.subr.bf16.mxu0 0
        %1299 = vmatpush1.bf16.msra.mxu0 0
        %1300 = vmatprep.subr.bf16.mxu0 0
        %1301 = vmatpush1.bf16.msra.mxu0 0
        %1302 = vmatprep.subr.bf16.mxu0 0
        %1303 = vmatpush1.bf16.msra.mxu0 0
        %1304 = vmatprep.mubr.bf16.mxu0 0
        %1305 = vmatmul.mubr.bf16.gmra.mrb[0].mxu0 %v1270
        %v1306 = vpop.f32.mrb[0].mxu0
        %v1307 = vadd.f32 %v1236, %v1306
        %v1308 = vpop.f32.mrb[0].mxu0
        %v1309 = vpop.f32.mrb[0].mxu0
        %v1310 = vadd.f32 %v1241, %v1309
        %v1311 = vpop.f32.mrb[0].mxu0
        %1312 = vdwg.mxu0
        %v1313 = vmax.f32 %v1307, 0.0
        %v1314 = vmax.f32 %v1310, 0.0
        %v1315 = vld [vmem:[%s11] sm:$0xf]
        %v1316 = vld [vmem:[%s11 + $0x4] sm:$0xf]
        %v1317 = vpack.c.bf16 %v1314, %v1313
        %v1320 = vunpack.c.l.b16 %v1315
        %v1321 = vunpack.c.l.b16 %v1316
        %v1322 = vpack.c.b16 %v1321, %v1320
        %v1324 = vsel %vm1063, %v1322, 0
        %1326 = vmatprep.subr.bf16.mxu0 0
        %1327 = vmatpush1.bf16.msra.mxu0 %v1317
        %1328 = vmatprep.subr.bf16.mxu0 0
        %1329 = vmatpush1.bf16.msra.mxu0 0
        %1330 = vmatprep.subr.bf16.mxu0 0
        %1331 = vmatpush1.bf16.msra.mxu0 0
        %1332 = vmatprep.subr.bf16.mxu0 0
        %1333 = vmatpush1.bf16.msra.mxu0 0
        %1334 = vmatprep.subr.bf16.mxu0 0
        %1335 = vmatpush1.bf16.msra.mxu0 0
        %1336 = vmatprep.subr.bf16.mxu0 0
        %1337 = vmatpush1.bf16.msra.mxu0 0
        %1338 = vmatprep.subr.bf16.mxu0 0
        %1339 = vmatpush1.bf16.msra.mxu0 0
        %1340 = vmatprep.subr.bf16.mxu0 0
        %1341 = vmatpush1.bf16.msra.mxu0 0
        %1342 = vmatprep.subr.bf16.mxu0 0
        %1343 = vmatpush1.bf16.msra.mxu0 0
        %1344 = vmatprep.subr.bf16.mxu0 0
        %1345 = vmatpush1.bf16.msra.mxu0 0
        %1346 = vmatprep.subr.bf16.mxu0 0
        %1347 = vmatpush1.bf16.msra.mxu0 0
        %1348 = vmatprep.subr.bf16.mxu0 0
        %1349 = vmatpush1.bf16.msra.mxu0 0
        %1350 = vmatprep.subr.bf16.mxu0 0
        %1351 = vmatpush1.bf16.msra.mxu0 0
        %1352 = vmatprep.subr.bf16.mxu0 0
        %1353 = vmatpush1.bf16.msra.mxu0 0
        %1354 = vmatprep.subr.bf16.mxu0 0
        %1355 = vmatpush1.bf16.msra.mxu0 0
        %1356 = vmatprep.subr.bf16.mxu0 0
        %1357 = vmatpush1.bf16.msra.mxu0 0
        %1358 = vmatprep.mubr.bf16.mxu0 0
        %1359 = vmatmul.mubr.bf16.gmra.mrb[0].mxu0 %v1324
        %v1360 = vpop.f32.mrb[0].mxu0
        %v1361 = vadd.f32 0.0, %v1360
        %v1362 = vpop.f32.mrb[0].mxu0
        %v1363 = vpop.f32.mrb[0].mxu0
        %v1364 = vadd.f32 0.0, %v1363
        %v1365 = vpop.f32.mrb[0].mxu0
        %1366 = vdwg.mxu0
        %v1367 = vadd.f32 %v1195, %v1361
        %v1368 = vadd.f32 %v1198, %v1364
        %v1369 = vld [vmem:[%s12] sm:$0xff]
        %v1370 = vld [vmem:[%s12 + $0x8] sm:$0xff]
        %1372 = vset.pattern.permute.xlu0 0
        %1373 = vperm.xlu0 %1372, %v1369
        %v1374 = vpop.permute.xlu0 %1373
        %1377 = vset.pattern.permute.xlu0 0
        %1378 = vperm.xlu0 %1377, %v1370
        %v1379 = vpop.permute.xlu0 %1378
        %v1381 = vadd.f32 %v1367, %v1374
        %v1382 = vadd.f32 %v1368, %v1379
        %1383 = vst [vmem:[#allocation2 + $0x8] sm:$0xff] %v1381
        %1384 = vst [vmem:[#allocation2 + $0x20] sm:$0xff] %v1382
        %v1385 = vld [vmem:[#allocation2] sm:$0xff]
        %v1386 = vld [vmem:[#allocation2 + $0x8] sm:$0xff]
        %v1387 = vld [vmem:[#allocation2 + $0x10] sm:$0xff]
        %v1388 = vld [vmem:[#allocation2 + $0x18] sm:$0xff]
        %v1389 = vld [vmem:[#allocation2 + $0x20] sm:$0xff]
        %v1390 = vld [vmem:[#allocation2 + $0x28] sm:$0xff]
        %1393 = vrot.lane.b32.xlu0 %v1386, 126
        %v1394 = vpop.permute.xlu0 %1393
        %1395 = vrot.lane.b32.xlu0 %v1389, 126
        %v1396 = vpop.permute.xlu0 %1395
        %1401 = vrot.lane.b32.xlu0 %v1386, 124
        %v1402 = vpop.permute.xlu0 %1401
        %1403 = vrot.lane.b32.xlu0 %v1387, 124
        %v1404 = vpop.permute.xlu0 %1403
        %1405 = vrot.lane.b32.xlu0 %v1389, 124
        %v1406 = vpop.permute.xlu0 %1405
        %1407 = vrot.lane.b32.xlu0 %v1390, 124
        %v1408 = vpop.permute.xlu0 %1407
        %v1409 = vsel %vm770, %v1402, %v1404
        %v1410 = vsel %vm770, %v1406, %v1408
        %s1415 = scalar_lea.vmem %s9, 8
        %v1416 = vld [vmem:[%s1415] sm:$0xf]
        %v1417 = vld [vmem:[%s1415 + $0x4] sm:$0xf]
        %v1418 = vpack.c.bf16 %v1388, %v1385
        %v1419 = vpack.c.bf16 %v1389, %v1386
        %v1420 = vpack.c.bf16 %v1396, %v1394
        %v1421 = vpack.c.bf16 %v1406, %v1402
        %v1422 = vpack.c.bf16 %v1410, %v1409
        %s1423 = scalar_lea.vmem %s10, 16
        %v1424 = vld [vmem:[%s1423] sm:$0xff]
        %v1425 = vld [vmem:[%s1423 + $0x8] sm:$0xff]
        %1427 = vset.pattern.permute.xlu0 0
        %1428 = vperm.xlu0 %1427, %v1424
        %v1429 = vpop.permute.xlu0 %1428
        %1432 = vset.pattern.permute.xlu0 0
        %1433 = vperm.xlu0 %1432, %v1425
        %v1434 = vpop.permute.xlu0 %1433
        %v1438 = vunpack.c.l.b16 %v1416
        %v1439 = vunpack.c.l.b16 %v1417
        %v1440 = vpack.c.b16 %v1439, %v1438
        %1446 = vrot.lane.b32.xlu0 %v1418, 2
        %v1447 = vpop.permute.xlu0 %1446
        %1448 = vrot.lane.b32.xlu0 %v1419, 2
        %v1449 = vpop.permute.xlu0 %1448
        %1450 = vrot.lane.b32.xlu0 %v1420, 2
        %v1451 = vpop.permute.xlu0 %1450
        %1452 = vrot.lane.b32.xlu0 %v1421, 2
        %v1453 = vpop.permute.xlu0 %1452
        %1454 = vrot.lane.b32.xlu0 %v1422, 2
        %v1455 = vpop.permute.xlu0 %1454
        %v1456 = vsel %vm818, %v1447, %v1449
        %v1457 = vsel %vm818, %v1453, %v1455
        %v1462 = vsel %vm1268, %v1440, 0
        %1464 = vmatprep.subr.bf16.mxu0 0
        %1465 = vmatpush1.bf16.msra.mxu0 %v1456
        %1466 = vmatprep.subr.bf16.mxu0 0
        %1467 = vmatpush1.bf16.msra.mxu0 %v1451
        %1468 = vmatprep.subr.bf16.mxu0 0
        %1469 = vmatpush1.bf16.msra.mxu0 %v1457
        %1470 = vmatprep.subr.bf16.mxu0 0
        %1471 = vmatpush1.bf16.msra.mxu0 0
        %1472 = vmatprep.subr.bf16.mxu0 0
        %1473 = vmatpush1.bf16.msra.mxu0 0
        %1474 = vmatprep.subr.bf16.mxu0 0
        %1475 = vmatpush1.bf16.msra.mxu0 0
        %1476 = vmatprep.subr.bf16.mxu0 0
        %1477 = vmatpush1.bf16.msra.mxu0 0
        %1478 = vmatprep.subr.bf16.mxu0 0
        %1479 = vmatpush1.bf16.msra.mxu0 0
        %1480 = vmatprep.subr.bf16.mxu0 0
        %1481 = vmatpush1.bf16.msra.mxu0 0
        %1482 = vmatprep.subr.bf16.mxu0 0
        %1483 = vmatpush1.bf16.msra.mxu0 0
        %1484 = vmatprep.subr.bf16.mxu0 0
        %1485 = vmatpush1.bf16.msra.mxu0 0
        %1486 = vmatprep.subr.bf16.mxu0 0
        %1487 = vmatpush1.bf16.msra.mxu0 0
        %1488 = vmatprep.subr.bf16.mxu0 0
        %1489 = vmatpush1.bf16.msra.mxu0 0
        %1490 = vmatprep.subr.bf16.mxu0 0
        %1491 = vmatpush1.bf16.msra.mxu0 0
        %1492 = vmatprep.subr.bf16.mxu0 0
        %1493 = vmatpush1.bf16.msra.mxu0 0
        %1494 = vmatprep.subr.bf16.mxu0 0
        %1495 = vmatpush1.bf16.msra.mxu0 0
        %1496 = vmatprep.mubr.bf16.mxu0 0
        %1497 = vmatmul.mubr.bf16.gmra.mrb[0].mxu0 %v1462
        %v1498 = vpop.f32.mrb[0].mxu0
        %v1499 = vadd.f32 %v1429, %v1498
        %v1500 = vpop.f32.mrb[0].mxu0
        %v1501 = vpop.f32.mrb[0].mxu0
        %v1502 = vadd.f32 %v1434, %v1501
        %v1503 = vpop.f32.mrb[0].mxu0
        %1504 = vdwg.mxu0
        %v1505 = vmax.f32 %v1499, 0.0
        %v1506 = vmax.f32 %v1502, 0.0
        %s1507 = scalar_lea.vmem %s11, 8
        %v1508 = vld [vmem:[%s1507] sm:$0xf]
        %v1509 = vld [vmem:[%s1507 + $0x4] sm:$0xf]
        %v1510 = vpack.c.bf16 %v1506, %v1505
        %v1513 = vunpack.c.l.b16 %v1508
        %v1514 = vunpack.c.l.b16 %v1509
        %v1515 = vpack.c.b16 %v1514, %v1513
        %v1517 = vsel %vm1063, %v1515, 0
        %1519 = vmatprep.subr.bf16.mxu0 0
        %1520 = vmatpush1.bf16.msra.mxu0 %v1510
        %1521 = vmatprep.subr.bf16.mxu0 0
        %1522 = vmatpush1.bf16.msra.mxu0 0
        %1523 = vmatprep.subr.bf16.mxu0 0
        %1524 = vmatpush1.bf16.msra.mxu0 0
        %1525 = vmatprep.subr.bf16.mxu0 0
        %1526 = vmatpush1.bf16.msra.mxu0 0
        %1527 = vmatprep.subr.bf16.mxu0 0
        %1528 = vmatpush1.bf16.msra.mxu0 0
        %1529 = vmatprep.subr.bf16.mxu0 0
        %1530 = vmatpush1.bf16.msra.mxu0 0
        %1531 = vmatprep.subr.bf16.mxu0 0
        %1532 = vmatpush1.bf16.msra.mxu0 0
        %1533 = vmatprep.subr.bf16.mxu0 0
        %1534 = vmatpush1.bf16.msra.mxu0 0
        %1535 = vmatprep.subr.bf16.mxu0 0
        %1536 = vmatpush1.bf16.msra.mxu0 0
        %1537 = vmatprep.subr.bf16.mxu0 0
        %1538 = vmatpush1.bf16.msra.mxu0 0
        %1539 = vmatprep.subr.bf16.mxu0 0
        %1540 = vmatpush1.bf16.msra.mxu0 0
        %1541 = vmatprep.subr.bf16.mxu0 0
        %1542 = vmatpush1.bf16.msra.mxu0 0
        %1543 = vmatprep.subr.bf16.mxu0 0
        %1544 = vmatpush1.bf16.msra.mxu0 0
        %1545 = vmatprep.subr.bf16.mxu0 0
        %1546 = vmatpush1.bf16.msra.mxu0 0
        %1547 = vmatprep.subr.bf16.mxu0 0
        %1548 = vmatpush1.bf16.msra.mxu0 0
        %1549 = vmatprep.subr.bf16.mxu0 0
        %1550 = vmatpush1.bf16.msra.mxu0 0
        %1551 = vmatprep.mubr.bf16.mxu0 0
        %1552 = vmatmul.mubr.bf16.gmra.mrb[0].mxu0 %v1517
        %v1553 = vpop.f32.mrb[0].mxu0
        %v1554 = vadd.f32 0.0, %v1553
        %v1555 = vpop.f32.mrb[0].mxu0
        %v1556 = vpop.f32.mrb[0].mxu0
        %v1557 = vadd.f32 0.0, %v1556
        %v1558 = vpop.f32.mrb[0].mxu0
        %1559 = vdwg.mxu0
        %v1560 = vadd.f32 %v1386, %v1554
        %v1561 = vadd.f32 %v1389, %v1557
        %s1562 = scalar_lea.vmem %s12, 16
        %v1563 = vld [vmem:[%s1562] sm:$0xff]
        %v1564 = vld [vmem:[%s1562 + $0x8] sm:$0xff]
        %1566 = vset.pattern.permute.xlu0 0
        %1567 = vperm.xlu0 %1566, %v1563
        %v1568 = vpop.permute.xlu0 %1567
        %1571 = vset.pattern.permute.xlu0 0
        %1572 = vperm.xlu0 %1571, %v1564
        %v1573 = vpop.permute.xlu0 %1572
        %v1575 = vadd.f32 %v1560, %v1568
        %v1576 = vadd.f32 %v1561, %v1573
        %1577 = vst [vmem:[#allocation2 + $0x8] sm:$0xff] %v1575
        %1578 = vst [vmem:[#allocation2 + $0x20] sm:$0xff] %v1576
        %v1579 = vld [vmem:[%s13] sm:$0xf]
        %v1580 = vld [vmem:[#allocation2 + $0x8] sm:$0xff]
        %v1581 = vld [vmem:[#allocation2 + $0x20] sm:$0xff]
        %v1582 = vpack.c.bf16 %v1581, %v1580
        %v1583 = vld [vmem:[%s14] sm:$0xff]
        %1585 = vset.pattern.permute.xlu0 0
        %1586 = vperm.xlu0 %1585, %v1583
        %v1587 = vpop.permute.xlu0 %1586
        %v1590 = vsel %vm1063, %v1579, 0
        %1592 = vmatprep.subr.bf16.mxu0 0
        %1593 = vmatpush1.bf16.msra.mxu0 %v1582
        %1594 = vmatprep.subr.bf16.mxu0 0
        %1595 = vmatpush1.bf16.msra.mxu0 0
        %1596 = vmatprep.subr.bf16.mxu0 0
        %1597 = vmatpush1.bf16.msra.mxu0 0
        %1598 = vmatprep.subr.bf16.mxu0 0
        %1599 = vmatpush1.bf16.msra.mxu0 0
        %1600 = vmatprep.subr.bf16.mxu0 0
        %1601 = vmatpush1.bf16.msra.mxu0 0
        %1602 = vmatprep.subr.bf16.mxu0 0
        %1603 = vmatpush1.bf16.msra.mxu0 0
        %1604 = vmatprep.subr.bf16.mxu0 0
        %1605 = vmatpush1.bf16.msra.mxu0 0
        %1606 = vmatprep.subr.bf16.mxu0 0
        %1607 = vmatpush1.bf16.msra.mxu0 0
        %1608 = vmatprep.subr.bf16.mxu0 0
        %1609 = vmatpush1.bf16.msra.mxu0 0
        %1610 = vmatprep.subr.bf16.mxu0 0
        %1611 = vmatpush1.bf16.msra.mxu0 0
        %1612 = vmatprep.subr.bf16.mxu0 0
        %1613 = vmatpush1.bf16.msra.mxu0 0
        %1614 = vmatprep.subr.bf16.mxu0 0
        %1615 = vmatpush1.bf16.msra.mxu0 0
        %1616 = vmatprep.subr.bf16.mxu0 0
        %1617 = vmatpush1.bf16.msra.mxu0 0
        %1618 = vmatprep.subr.bf16.mxu0 0
        %1619 = vmatpush1.bf16.msra.mxu0 0
        %1620 = vmatprep.subr.bf16.mxu0 0
        %1621 = vmatpush1.bf16.msra.mxu0 0
        %1622 = vmatprep.subr.bf16.mxu0 0
        %1623 = vmatpush1.bf16.msra.mxu0 0
        %1624 = vmatprep.mubr.bf16.mxu0 0
        %1625 = vmatmul.mubr.bf16.gmra.mrb[0].mxu0 %v1590
        %v1626 = vpop.f32.mrb[0].mxu0
        %v1627 = vadd.f32 %v1587, %v1626
        %v1628 = vpop.f32.mrb[0].mxu0
        %v1629 = vpop.f32.mrb[0].mxu0
        %v1630 = vpop.f32.mrb[0].mxu0
        %1631 = vdwg.mxu0
        %s1632 = scalar_lea.vmem %s485, 8 [#allocation3]
        %1633 = vst [vmem:[%s1632] sm:$0xff] %v1627
        %v1634 = vrot.slane %v1627, 4
        %v1635 = vmax.f32 %v1627, %v1634
        %v1636 = vrot.slane %v1635, 2
        %v1637 = vmax.f32 %v1635, %v1636
        %v1638 = vrot.slane %v1637, 1
        %v1639 = vmax.f32 %v1637, %v1638
        %v1640 = vsub.f32 %v1627, %v1639
        %v1641 = vmul.f32 %v1640, 1.442695
        %v1642 = vpow.pop %v1641
        %v1643 = vrot.slane %v1642, 4
        %v1644 = vadd.f32 %v1642, %v1643
        %v1645 = vrot.slane %v1644, 2
        %v1646 = vadd.f32 %v1644, %v1645
        %v1647 = vrot.slane %v1646, 1
        %v1648 = vadd.f32 %v1646, %v1647
        %v1649 = vrcp.pop %v1648
        %v1650 = vmul.f32 %v1642, %v1649
        %s1651 = scalar_lea.vmem %s7, 8
        %v1652 = vld [vmem:[%s1651] sm:$0xf]
        %v1653 = vld [vmem:[%s1651 + $0x4] sm:$0xf]
        %v1654 = vpack.c.bf16 %v1650, %v1650
        %s1655 = scalar_lea.vmem %s8, 16
        %v1656 = vld [vmem:[%s1655] sm:$0xff]
        %v1657 = vld [vmem:[%s1655 + $0x8] sm:$0xff]
        %1659 = vset.pattern.permute.xlu0 0
        %1660 = vperm.xlu0 %1659, %v1656
        %v1661 = vpop.permute.xlu0 %1660
        %1664 = vset.pattern.permute.xlu0 0
        %1665 = vperm.xlu0 %1664, %v1657
        %v1666 = vpop.permute.xlu0 %1665
        %v1670 = vunpack.c.l.b16 %v1652
        %v1671 = vunpack.c.l.b16 %v1653
        %v1672 = vpack.c.b16 %v1671, %v1670
        %v1674 = vsel %vm516, %v1672, 0
        %v1677 = vsel %vm520, %v1654, 0
        %1679 = vmatprep.subr.bf16.mxu0 0
        %1680 = vmatpush1.bf16.msra.mxu0 %v1677
        %1681 = vmatprep.subr.bf16.mxu0 0
        %1682 = vmatpush1.bf16.msra.mxu0 0
        %1683 = vmatprep.subr.bf16.mxu0 0
        %1684 = vmatpush1.bf16.msra.mxu0 0
        %1685 = vmatprep.subr.bf16.mxu0 0
        %1686 = vmatpush1.bf16.msra.mxu0 0
        %1687 = vmatprep.subr.bf16.mxu0 0
        %1688 = vmatpush1.bf16.msra.mxu0 0
        %1689 = vmatprep.subr.bf16.mxu0 0
        %1690 = vmatpush1.bf16.msra.mxu0 0
        %1691 = vmatprep.subr.bf16.mxu0 0
        %1692 = vmatpush1.bf16.msra.mxu0 0
        %1693 = vmatprep.subr.bf16.mxu0 0
        %1694 = vmatpush1.bf16.msra.mxu0 0
        %1695 = vmatprep.subr.bf16.mxu0 0
        %1696 = vmatpush1.bf16.msra.mxu0 0
        %1697 = vmatprep.subr.bf16.mxu0 0
        %1698 = vmatpush1.bf16.msra.mxu0 0
        %1699 = vmatprep.subr.bf16.mxu0 0
        %1700 = vmatpush1.bf16.msra.mxu0 0
        %1701 = vmatprep.subr.bf16.mxu0 0
        %1702 = vmatpush1.bf16.msra.mxu0 0
        %1703 = vmatprep.subr.bf16.mxu0 0
        %1704 = vmatpush1.bf16.msra.mxu0 0
        %1705 = vmatprep.subr.bf16.mxu0 0
        %1706 = vmatpush1.bf16.msra.mxu0 0
        %1707 = vmatprep.subr.bf16.mxu0 0
        %1708 = vmatpush1.bf16.msra.mxu0 0
        %1709 = vmatprep.subr.bf16.mxu0 0
        %1710 = vmatpush1.bf16.msra.mxu0 0
        %1711 = vmatprep.mubr.bf16.mxu0 0
        %1712 = vmatmul.mubr.bf16.gmra.mrb[0].mxu0 %v1674
        %v1713 = vpop.f32.mrb[0].mxu0
        %v1714 = vadd.f32 %v1661, %v1713
        %v1715 = vpop.f32.mrb[0].mxu0
        %v1716 = vpop.f32.mrb[0].mxu0
        %v1717 = vadd.f32 %v1666, %v1716
        %v1718 = vpop.f32.mrb[0].mxu0
        %1719 = vdwg.mxu0
        %1720 = vst [vmem:[#allocation2 + $0x8] sm:$0xff] %v1714
        %1721 = vst [vmem:[#allocation2 + $0x20] sm:$0xff] %v1717
        %v1722 = vld [vmem:[#allocation2] sm:$0xff]
        %v1723 = vld [vmem:[#allocation2 + $0x8] sm:$0xff]
        %v1724 = vld [vmem:[#allocation2 + $0x10] sm:$0xff]
        %v1725 = vld [vmem:[#allocation2 + $0x18] sm:$0xff]
        %v1726 = vld [vmem:[#allocation2 + $0x20] sm:$0xff]
        %v1727 = vld [vmem:[#allocation2 + $0x28] sm:$0xff]
        %1730 = vrot.lane.b32.xlu0 %v1723, 127
        %v1731 = vpop.permute.xlu0 %1730
        %1732 = vrot.lane.b32.xlu0 %v1726, 127
        %v1733 = vpop.permute.xlu0 %1732
        %1738 = vrot.lane.b32.xlu0 %v1723, 126
        %v1739 = vpop.permute.xlu0 %1738
        %1740 = vrot.lane.b32.xlu0 %v1724, 126
        %v1741 = vpop.permute.xlu0 %1740
        %1742 = vrot.lane.b32.xlu0 %v1726, 126
        %v1743 = vpop.permute.xlu0 %1742
        %1744 = vrot.lane.b32.xlu0 %v1727, 126
        %v1745 = vpop.permute.xlu0 %1744
        %v1746 = vsel %vm898, %v1739, %v1741
        %v1747 = vsel %vm898, %v1743, %v1745
        %s1752 = scalar_lea.vmem %s9, 16
        %v1753 = vld [vmem:[%s1752] sm:$0xf]
        %v1754 = vld [vmem:[%s1752 + $0x4] sm:$0xf]
        %v1755 = vpack.c.bf16 %v1725, %v1722
        %v1756 = vpack.c.bf16 %v1726, %v1723
        %v1757 = vpack.c.bf16 %v1733, %v1731
        %v1758 = vpack.c.bf16 %v1743, %v1739
        %v1759 = vpack.c.bf16 %v1747, %v1746
        %s1760 = scalar_lea.vmem %s10, 32
        %v1761 = vld [vmem:[%s1760] sm:$0xff]
        %v1762 = vld [vmem:[%s1760 + $0x8] sm:$0xff]
        %1764 = vset.pattern.permute.xlu0 0
        %1765 = vperm.xlu0 %1764, %v1761
        %v1766 = vpop.permute.xlu0 %1765
        %1769 = vset.pattern.permute.xlu0 0
        %1770 = vperm.xlu0 %1769, %v1762
        %v1771 = vpop.permute.xlu0 %1770
        %v1775 = vunpack.c.l.b16 %v1753
        %v1776 = vunpack.c.l.b16 %v1754
        %v1777 = vpack.c.b16 %v1776, %v1775
        %1783 = vrot.lane.b32.xlu0 %v1755, 1
        %v1784 = vpop.permute.xlu0 %1783
        %1785 = vrot.lane.b32.xlu0 %v1756, 1
        %v1786 = vpop.permute.xlu0 %1785
        %1787 = vrot.lane.b32.xlu0 %v1757, 1
        %v1788 = vpop.permute.xlu0 %1787
        %1789 = vrot.lane.b32.xlu0 %v1758, 1
        %v1790 = vpop.permute.xlu0 %1789
        %1791 = vrot.lane.b32.xlu0 %v1759, 1
        %v1792 = vpop.permute.xlu0 %1791
        %v1793 = vsel %vm993, %v1784, %v1786
        %v1794 = vsel %vm993, %v1790, %v1792
        %v1799 = vsel %vm1268, %v1777, 0
        %1801 = vmatprep.subr.bf16.mxu0 0
        %1802 = vmatpush1.bf16.msra.mxu0 %v1793
        %1803 = vmatprep.subr.bf16.mxu0 0
        %1804 = vmatpush1.bf16.msra.mxu0 %v1788
        %1805 = vmatprep.subr.bf16.mxu0 0
        %1806 = vmatpush1.bf16.msra.mxu0 %v1794
        %1807 = vmatprep.subr.bf16.mxu0 0
        %1808 = vmatpush1.bf16.msra.mxu0 0
        %1809 = vmatprep.subr.bf16.mxu0 0
        %1810 = vmatpush1.bf16.msra.mxu0 0
        %1811 = vmatprep.subr.bf16.mxu0 0
        %1812 = vmatpush1.bf16.msra.mxu0 0
        %1813 = vmatprep.subr.bf16.mxu0 0
        %1814 = vmatpush1.bf16.msra.mxu0 0
        %1815 = vmatprep.subr.bf16.mxu0 0
        %1816 = vmatpush1.bf16.msra.mxu0 0
        %1817 = vmatprep.subr.bf16.mxu0 0
        %1818 = vmatpush1.bf16.msra.mxu0 0
        %1819 = vmatprep.subr.bf16.mxu0 0
        %1820 = vmatpush1.bf16.msra.mxu0 0
        %1821 = vmatprep.subr.bf16.mxu0 0
        %1822 = vmatpush1.bf16.msra.mxu0 0
        %1823 = vmatprep.subr.bf16.mxu0 0
        %1824 = vmatpush1.bf16.msra.mxu0 0
        %1825 = vmatprep.subr.bf16.mxu0 0
        %1826 = vmatpush1.bf16.msra.mxu0 0
        %1827 = vmatprep.subr.bf16.mxu0 0
        %1828 = vmatpush1.bf16.msra.mxu0 0
        %1829 = vmatprep.subr.bf16.mxu0 0
        %1830 = vmatpush1.bf16.msra.mxu0 0
        %1831 = vmatprep.subr.bf16.mxu0 0
        %1832 = vmatpush1.bf16.msra.mxu0 0
        %1833 = vmatprep.mubr.bf16.mxu0 0
        %1834 = vmatmul.mubr.bf16.gmra.mrb[0].mxu0 %v1799
        %v1835 = vpop.f32.mrb[0].mxu0
        %v1836 = vadd.f32 %v1766, %v1835
        %v1837 = vpop.f32.mrb[0].mxu0
        %v1838 = vpop.f32.mrb[0].mxu0
        %v1839 = vadd.f32 %v1771, %v1838
        %v1840 = vpop.f32.mrb[0].mxu0
        %1841 = vdwg.mxu0
        %v1842 = vmax.f32 %v1836, 0.0
        %v1843 = vmax.f32 %v1839, 0.0
        %s1844 = scalar_lea.vmem %s11, 16
        %v1845 = vld [vmem:[%s1844] sm:$0xf]
        %v1846 = vld [vmem:[%s1844 + $0x4] sm:$0xf]
        %v1847 = vpack.c.bf16 %v1843, %v1842
        %v1850 = vunpack.c.l.b16 %v1845
        %v1851 = vunpack.c.l.b16 %v1846
        %v1852 = vpack.c.b16 %v1851, %v1850
        %v1854 = vsel %vm1063, %v1852, 0
        %1856 = vmatprep.subr.bf16.mxu0 0
        %1857 = vmatpush1.bf16.msra.mxu0 %v1847
        %1858 = vmatprep.subr.bf16.mxu0 0
        %1859 = vmatpush1.bf16.msra.mxu0 0
        %1860 = vmatprep.subr.bf16.mxu0 0
        %1861 = vmatpush1.bf16.msra.mxu0 0
        %1862 = vmatprep.subr.bf16.mxu0 0
        %1863 = vmatpush1.bf16.msra.mxu0 0
        %1864 = vmatprep.subr.bf16.mxu0 0
        %1865 = vmatpush1.bf16.msra.mxu0 0
        %1866 = vmatprep.subr.bf16.mxu0 0
        %1867 = vmatpush1.bf16.msra.mxu0 0
        %1868 = vmatprep.subr.bf16.mxu0 0
        %1869 = vmatpush1.bf16.msra.mxu0 0
        %1870 = vmatprep.subr.bf16.mxu0 0
        %1871 = vmatpush1.bf16.msra.mxu0 0
        %1872 = vmatprep.subr.bf16.mxu0 0
        %1873 = vmatpush1.bf16.msra.mxu0 0
        %1874 = vmatprep.subr.bf16.mxu0 0
        %1875 = vmatpush1.bf16.msra.mxu0 0
        %1876 = vmatprep.subr.bf16.mxu0 0
        %1877 = vmatpush1.bf16.msra.mxu0 0
        %1878 = vmatprep.subr.bf16.mxu0 0
        %1879 = vmatpush1.bf16.msra.mxu0 0
        %1880 = vmatprep.subr.bf16.mxu0 0
        %1881 = vmatpush1.bf16.msra.mxu0 0
        %1882 = vmatprep.subr.bf16.mxu0 0
        %1883 = vmatpush1.bf16.msra.mxu0 0
        %1884 = vmatprep.subr.bf16.mxu0 0
        %1885 = vmatpush1.bf16.msra.mxu0 0
        %1886 = vmatprep.subr.bf16.mxu0 0
        %1887 = vmatpush1.bf16.msra.mxu0 0
        %1888 = vmatprep.mubr.bf16.mxu0 0
        %1889 = vmatmul.mubr.bf16.gmra.mrb[0].mxu0 %v1854
        %v1890 = vpop.f32.mrb[0].mxu0
        %v1891 = vadd.f32 0.0, %v1890
        %v1892 = vpop.f32.mrb[0].mxu0
        %v1893 = vpop.f32.mrb[0].mxu0
        %v1894 = vadd.f32 0.0, %v1893
        %v1895 = vpop.f32.mrb[0].mxu0
        %1896 = vdwg.mxu0
        %v1897 = vadd.f32 %v1723, %v1891
        %v1898 = vadd.f32 %v1726, %v1894
        %s1899 = scalar_lea.vmem %s12, 32
        %v1900 = vld [vmem:[%s1899] sm:$0xff]
        %v1901 = vld [vmem:[%s1899 + $0x8] sm:$0xff]
        %1903 = vset.pattern.permute.xlu0 0
        %1904 = vperm.xlu0 %1903, %v1900
        %v1905 = vpop.permute.xlu0 %1904
        %1908 = vset.pattern.permute.xlu0 0
        %1909 = vperm.xlu0 %1908, %v1901
        %v1910 = vpop.permute.xlu0 %1909
        %v1912 = vadd.f32 %v1897, %v1905
        %v1913 = vadd.f32 %v1898, %v1910
        %1914 = vst [vmem:[#allocation2 + $0x8] sm:$0xff] %v1912
        %1915 = vst [vmem:[#allocation2 + $0x20] sm:$0xff] %v1913
        %v1916 = vld [vmem:[#allocation2] sm:$0xff]
        %v1917 = vld [vmem:[#allocation2 + $0x8] sm:$0xff]
        %v1918 = vld [vmem:[#allocation2 + $0x10] sm:$0xff]
        %v1919 = vld [vmem:[#allocation2 + $0x18] sm:$0xff]
        %v1920 = vld [vmem:[#allocation2 + $0x20] sm:$0xff]
        %v1921 = vld [vmem:[#allocation2 + $0x28] sm:$0xff]
        %1924 = vrot.lane.b32.xlu0 %v1917, 126
        %v1925 = vpop.permute.xlu0 %1924
        %1926 = vrot.lane.b32.xlu0 %v1920, 126
        %v1927 = vpop.permute.xlu0 %1926
        %1932 = vrot.lane.b32.xlu0 %v1917, 124
        %v1933 = vpop.permute.xlu0 %1932
        %1934 = vrot.lane.b32.xlu0 %v1918, 124
        %v1935 = vpop.permute.xlu0 %1934
        %1936 = vrot.lane.b32.xlu0 %v1920, 124
        %v1937 = vpop.permute.xlu0 %1936
        %1938 = vrot.lane.b32.xlu0 %v1921, 124
        %v1939 = vpop.permute.xlu0 %1938
        %v1940 = vsel %vm770, %v1933, %v1935
        %v1941 = vsel %vm770, %v1937, %v1939
        %s1946 = scalar_lea.vmem %s9, 24
        %v1947 = vld [vmem:[%s1946] sm:$0xf]
        %v1948 = vld [vmem:[%s1946 + $0x4] sm:$0xf]
        %v1949 = vpack.c.bf16 %v1919, %v1916
        %v1950 = vpack.c.bf16 %v1920, %v1917
        %v1951 = vpack.c.bf16 %v1927, %v1925
        %v1952 = vpack.c.bf16 %v1937, %v1933
        %v1953 = vpack.c.bf16 %v1941, %v1940
        %s1954 = scalar_lea.vmem %s10, 48
        %v1955 = vld [vmem:[%s1954] sm:$0xff]
        %v1956 = vld [vmem:[%s1954 + $0x8] sm:$0xff]
        %1958 = vset.pattern.permute.xlu0 0
        %1959 = vperm.xlu0 %1958, %v1955
        %v1960 = vpop.permute.xlu0 %1959
        %1963 = vset.pattern.permute.xlu0 0
        %1964 = vperm.xlu0 %1963, %v1956
        %v1965 = vpop.permute.xlu0 %1964
        %v1969 = vunpack.c.l.b16 %v1947
        %v1970 = vunpack.c.l.b16 %v1948
        %v1971 = vpack.c.b16 %v1970, %v1969
        %1977 = vrot.lane.b32.xlu0 %v1949, 2
        %v1978 = vpop.permute.xlu0 %1977
        %1979 = vrot.lane.b32.xlu0 %v1950, 2
        %v1980 = vpop.permute.xlu0 %1979
        %1981 = vrot.lane.b32.xlu0 %v1951, 2
        %v1982 = vpop.permute.xlu0 %1981
        %1983 = vrot.lane.b32.xlu0 %v1952, 2
        %v1984 = vpop.permute.xlu0 %1983
        %1985 = vrot.lane.b32.xlu0 %v1953, 2
        %v1986 = vpop.permute.xlu0 %1985
        %v1987 = vsel %vm818, %v1978, %v1980
        %v1988 = vsel %vm818, %v1984, %v1986
        %v1993 = vsel %vm1268, %v1971, 0
        %1995 = vmatprep.subr.bf16.mxu0 0
        %1996 = vmatpush1.bf16.msra.mxu0 %v1987
        %1997 = vmatprep.subr.bf16.mxu0 0
        %1998 = vmatpush1.bf16.msra.mxu0 %v1982
        %1999 = vmatprep.subr.bf16.mxu0 0
        %2000 = vmatpush1.bf16.msra.mxu0 %v1988
        %2001 = vmatprep.subr.bf16.mxu0 0
        %2002 = vmatpush1.bf16.msra.mxu0 0
        %2003 = vmatprep.subr.bf16.mxu0 0
        %2004 = vmatpush1.bf16.msra.mxu0 0
        %2005 = vmatprep.subr.bf16.mxu0 0
        %2006 = vmatpush1.bf16.msra.mxu0 0
        %2007 = vmatprep.subr.bf16.mxu0 0
        %2008 = vmatpush1.bf16.msra.mxu0 0
        %2009 = vmatprep.subr.bf16.mxu0 0
        %2010 = vmatpush1.bf16.msra.mxu0 0
        %2011 = vmatprep.subr.bf16.mxu0 0
        %2012 = vmatpush1.bf16.msra.mxu0 0
        %2013 = vmatprep.subr.bf16.mxu0 0
        %2014 = vmatpush1.bf16.msra.mxu0 0
        %2015 = vmatprep.subr.bf16.mxu0 0
        %2016 = vmatpush1.bf16.msra.mxu0 0
        %2017 = vmatprep.subr.bf16.mxu0 0
        %2018 = vmatpush1.bf16.msra.mxu0 0
        %2019 = vmatprep.subr.bf16.mxu0 0
        %2020 = vmatpush1.bf16.msra.mxu0 0
        %2021 = vmatprep.subr.bf16.mxu0 0
        %2022 = vmatpush1.bf16.msra.mxu0 0
        %2023 = vmatprep.subr.bf16.mxu0 0
        %2024 = vmatpush1.bf16.msra.mxu0 0
        %2025 = vmatprep.subr.bf16.mxu0 0
        %2026 = vmatpush1.bf16.msra.mxu0 0
        %2027 = vmatprep.mubr.bf16.mxu0 0
        %2028 = vmatmul.mubr.bf16.gmra.mrb[0].mxu0 %v1993
        %v2029 = vpop.f32.mrb[0].mxu0
        %v2030 = vadd.f32 %v1960, %v2029
        %v2031 = vpop.f32.mrb[0].mxu0
        %v2032 = vpop.f32.mrb[0].mxu0
        %v2033 = vadd.f32 %v1965, %v2032
        %v2034 = vpop.f32.mrb[0].mxu0
        %2035 = vdwg.mxu0
        %v2036 = vmax.f32 %v2030, 0.0
        %v2037 = vmax.f32 %v2033, 0.0
        %s2038 = scalar_lea.vmem %s11, 24
        %v2039 = vld [vmem:[%s2038] sm:$0xf]
        %v2040 = vld [vmem:[%s2038 + $0x4] sm:$0xf]
        %v2041 = vpack.c.bf16 %v2037, %v2036
        %v2044 = vunpack.c.l.b16 %v2039
        %v2045 = vunpack.c.l.b16 %v2040
        %v2046 = vpack.c.b16 %v2045, %v2044
        %v2048 = vsel %vm1063, %v2046, 0
        %2050 = vmatprep.subr.bf16.mxu0 0
        %2051 = vmatpush1.bf16.msra.mxu0 %v2041
        %2052 = vmatprep.subr.bf16.mxu0 0
        %2053 = vmatpush1.bf16.msra.mxu0 0
        %2054 = vmatprep.subr.bf16.mxu0 0
        %2055 = vmatpush1.bf16.msra.mxu0 0
        %2056 = vmatprep.subr.bf16.mxu0 0
        %2057 = vmatpush1.bf16.msra.mxu0 0
        %2058 = vmatprep.subr.bf16.mxu0 0
        %2059 = vmatpush1.bf16.msra.mxu0 0
        %2060 = vmatprep.subr.bf16.mxu0 0
        %2061 = vmatpush1.bf16.msra.mxu0 0
        %2062 = vmatprep.subr.bf16.mxu0 0
        %2063 = vmatpush1.bf16.msra.mxu0 0
        %2064 = vmatprep.subr.bf16.mxu0 0
        %2065 = vmatpush1.bf16.msra.mxu0 0
        %2066 = vmatprep.subr.bf16.mxu0 0
        %2067 = vmatpush1.bf16.msra.mxu0 0
        %2068 = vmatprep.subr.bf16.mxu0 0
        %2069 = vmatpush1.bf16.msra.mxu0 0
        %2070 = vmatprep.subr.bf16.mxu0 0
        %2071 = vmatpush1.bf16.msra.mxu0 0
        %2072 = vmatprep.subr.bf16.mxu0 0
        %2073 = vmatpush1.bf16.msra.mxu0 0
        %2074 = vmatprep.subr.bf16.mxu0 0
        %2075 = vmatpush1.bf16.msra.mxu0 0
        %2076 = vmatprep.subr.bf16.mxu0 0
        %2077 = vmatpush1.bf16.msra.mxu0 0
        %2078 = vmatprep.subr.bf16.mxu0 0
        %2079 = vmatpush1.bf16.msra.mxu0 0
        %2080 = vmatprep.subr.bf16.mxu0 0
        %2081 = vmatpush1.bf16.msra.mxu0 0
        %2082 = vmatprep.mubr.bf16.mxu0 0
        %2083 = vmatmul.mubr.bf16.gmra.mrb[0].mxu0 %v2048
        %v2084 = vpop.f32.mrb[0].mxu0
        %v2085 = vadd.f32 0.0, %v2084
        %v2086 = vpop.f32.mrb[0].mxu0
        %v2087 = vpop.f32.mrb[0].mxu0
        %v2088 = vadd.f32 0.0, %v2087
        %v2089 = vpop.f32.mrb[0].mxu0
        %2090 = vdwg.mxu0
        %v2091 = vadd.f32 %v1917, %v2085
        %v2092 = vadd.f32 %v1920, %v2088
        %s2093 = scalar_lea.vmem %s12, 48
        %v2094 = vld [vmem:[%s2093] sm:$0xff]
        %v2095 = vld [vmem:[%s2093 + $0x8] sm:$0xff]
        %2097 = vset.pattern.permute.xlu0 0
        %2098 = vperm.xlu0 %2097, %v2094
        %v2099 = vpop.permute.xlu0 %2098
        %2102 = vset.pattern.permute.xlu0 0
        %2103 = vperm.xlu0 %2102, %v2095
        %v2104 = vpop.permute.xlu0 %2103
        %v2106 = vadd.f32 %v2091, %v2099
        %v2107 = vadd.f32 %v2092, %v2104
        %2108 = vst [vmem:[#allocation2 + $0x8] sm:$0xff] %v2106
        %2109 = vst [vmem:[#allocation2 + $0x20] sm:$0xff] %v2107
        %s2110 = scalar_lea.vmem %s13, 4
        %v2111 = vld [vmem:[%s2110] sm:$0xf]
        %v2112 = vld [vmem:[#allocation2 + $0x8] sm:$0xff]
        %v2113 = vld [vmem:[#allocation2 + $0x20] sm:$0xff]
        %v2114 = vpack.c.bf16 %v2113, %v2112
        %s2115 = scalar_lea.vmem %s14, 8
        %v2116 = vld [vmem:[%s2115] sm:$0xff]
        %2118 = vset.pattern.permute.xlu0 0
        %2119 = vperm.xlu0 %2118, %v2116
        %v2120 = vpop.permute.xlu0 %2119
        %v2123 = vsel %vm1063, %v2111, 0
        %2125 = vmatprep.subr.bf16.mxu0 0
        %2126 = vmatpush1.bf16.msra.mxu0 %v2114
        %2127 = vmatprep.subr.bf16.mxu0 0
        %2128 = vmatpush1.bf16.msra.mxu0 0
        %2129 = vmatprep.subr.bf16.mxu0 0
        %2130 = vmatpush1.bf16.msra.mxu0 0
        %2131 = vmatprep.subr.bf16.mxu0 0
        %2132 = vmatpush1.bf16.msra.mxu0 0
        %2133 = vmatprep.subr.bf16.mxu0 0
        %2134 = vmatpush1.bf16.msra.mxu0 0
        %2135 = vmatprep.subr.bf16.mxu0 0
        %2136 = vmatpush1.bf16.msra.mxu0 0
        %2137 = vmatprep.subr.bf16.mxu0 0
        %2138 = vmatpush1.bf16.msra.mxu0 0
        %2139 = vmatprep.subr.bf16.mxu0 0
        %2140 = vmatpush1.bf16.msra.mxu0 0
        %2141 = vmatprep.subr.bf16.mxu0 0
        %2142 = vmatpush1.bf16.msra.mxu0 0
        %2143 = vmatprep.subr.bf16.mxu0 0
        %2144 = vmatpush1.bf16.msra.mxu0 0
        %2145 = vmatprep.subr.bf16.mxu0 0
        %2146 = vmatpush1.bf16.msra.mxu0 0
        %2147 = vmatprep.subr.bf16.mxu0 0
        %2148 = vmatpush1.bf16.msra.mxu0 0
        %2149 = vmatprep.subr.bf16.mxu0 0
        %2150 = vmatpush1.bf16.msra.mxu0 0
        %2151 = vmatprep.subr.bf16.mxu0 0
        %2152 = vmatpush1.bf16.msra.mxu0 0
        %2153 = vmatprep.subr.bf16.mxu0 0
        %2154 = vmatpush1.bf16.msra.mxu0 0
        %2155 = vmatprep.subr.bf16.mxu0 0
        %2156 = vmatpush1.bf16.msra.mxu0 0
        %2157 = vmatprep.mubr.bf16.mxu0 0
        %2158 = vmatmul.mubr.bf16.gmra.mrb[0].mxu0 %v2123
        %v2159 = vpop.f32.mrb[0].mxu0
        %v2160 = vadd.f32 %v2120, %v2159
        %v2161 = vpop.f32.mrb[0].mxu0
        %v2162 = vpop.f32.mrb[0].mxu0
        %v2163 = vpop.f32.mrb[0].mxu0
        %2164 = vdwg.mxu0
        %s2165 = scalar_lea.vmem %s485, 16 [#allocation3]
        %2166 = vst [vmem:[%s2165] sm:$0xff] %v2160
        %s2167 = sand.u32 %s357, 1
        %s2168 = scalar_lea.sflag [#allocation4], %s2167
        %s2169 = sand.u32 %s357, 1
        %s2170 = smul.addr %s2169, 24
        %s2171 = scalar_lea.vmem [#allocation3], %s2170
        // Predicated region
        $region81: #{tpu_custom_call.1} parent=79 // pred_check
          %p2172 = pneg %p367
        $region82: #{tpu_custom_call.1} parent=79 // pred_check_branch
          %2174 = sbr.rel (%p2172) target = $region84
        $region83: #{tpu_custom_call.1} parent=79 // pred_region
          %s2176 = ssub.s32 384, 384
          %2177 = vsyncadd %s2168, %s2176
          %s2178 = smul.addr %s29, 128
          %s2179 = scalar_lea.hbm %s15, %s2178
          %s2180 = sshll.u32 %s2171, 4
          %s2181 = int_to_ptr.vmem [resolvable:$true] %s2180
          %2186 = dma.vmem_to_hbm [thread:$0]  %s2181, 384, %s2179, %s2168, 128, 256, 8
        $region84: #{tpu_custom_call.1} parent=79 // pred_fallthru
          _
      $region80: #{tpu_custom_call.1} parent=5 // pred_fallthru
        _
      %p2187 = scmp.le.s32.totalorder 2, %s24
      // Predicated region
      $region85: #{tpu_custom_call.1} parent=5 // pred_check
        %p2188 = pneg %p2187
      $region86: #{tpu_custom_call.1} parent=5 // pred_check_branch
        %2190 = sbr.rel (%p2188) target = $region88
      $region87: #{tpu_custom_call.1} parent=5 // pred_region
        %s2191 = ssub.s32 %s24, 2
        // Predicated region
        $region89: #{tpu_custom_call.1} parent=87 // pred_check
          %p2192 = pneg %p373
        $region90: #{tpu_custom_call.1} parent=87 // pred_check_branch
          %2194 = sbr.rel (%p2192) target = $region92
        $region91: #{tpu_custom_call.1} parent=87 // pred_region
          %s2195 = sand.u32 %s358, 1
          %s2196 = scalar_lea.sflag [#allocation4], %s2195
          %s2197 = sand.u32 %s358, 1
          %s2198 = smul.addr %s2197, 24
          %s2199 = scalar_lea.vmem [#allocation3], %s2198
          %2200 = dma.done %s2196, 384
        $region92: #{tpu_custom_call.1} parent=87 // pred_fallthru
          _
      $region88: #{tpu_custom_call.1} parent=5 // pred_fallthru
        _
    $region6: #{tpu_custom_call.1} parent=1 // loop_footer
      %s28 = sadd.s32 1, %s24
    $region7: #{tpu_custom_call.1} parent=1 // loop_footer_branch
      %23 = sbr.rel target = $region3
    $region8: #{tpu_custom_call.1} parent=1 // loop_exit
      _
    %2201 = vsyncpa [#allocation4], 1
    %s2202 = scalar_lea.sflag [#allocation4], 1
    %2203 = vsyncpa %s2202, 1

</llo_original>
